<compile_context>
chip_gen: v7x
topology: tpu7x:2x2x1
jax: 0.10.0
libtpu: 0.0.40
codegen_flags: <defaults>
</compile_context>

<pallas_src>
import functools

import jax
import jax.numpy as jnp
from jax.experimental import pallas as pl
from jax.experimental.pallas import tpu as pltpu


def _round_up(n, m):
    return ((n + m - 1) // m) * m


def _sae_kernel(x_ref, w_ref, b_ref, o_ref, *, dims):
    """Fused forward: 6 x sigmoid(W @ h + b), all lane-dense in VMEM.

    x_ref: (C, TB)  f32   activation block, batch on the 128-lane axis
    w_ref: (6, P, P) bf16 zero-padded PyTorch-native (out, in) weights
    b_ref: (6, P, 1) f32  zero-padded biases (broadcast over lanes)
    o_ref: (C, TB)        output block
    """
    n_layers = len(dims) - 1
    c_in, c_out = dims[0], dims[-1]
    p = w_ref.shape[1]

    h = x_ref[...]                                        # (C, TB) f32
    for k in range(n_layers):
        w = w_ref[k]                                      # (P, P) bf16
        if k == 0 and c_in < p:
            w = w[:, :c_in]                               # first layer sees raw C inputs
        y = jnp.dot(w, h.astype(jnp.bfloat16),
                    preferred_element_type=jnp.float32)   # MXU, f32 accumulate -> (P, TB)
        y = y + b_ref[k]                                  # (P, TB) + (P, 1)
        # sigmoid via EUP exp + EUP approx reciprocal (padded rows give 0.5, but the
        # next layer's zero-padded weight columns annihilate them).
        h = pl.reciprocal(1.0 + jnp.exp(-y), approx=True)

    out = h[:c_out, :] if c_out < p else h                # drop zero-padded rows
    o_ref[...] = out.astype(o_ref.dtype)


def pack_params(params, n_channels):
    """Pack PyTorch-native (out,in) weights / (out,) biases into two padded blocks."""
    dims = (n_channels, 15, 10, 3, 10, 15, n_channels)
    n_layers = len(dims) - 1
    assert len(params) == n_layers
    p = _round_up(max(dims), 8)
    w_packed = jnp.zeros((n_layers, p, p), jnp.bfloat16)
    b_packed = jnp.zeros((n_layers, p, 1), jnp.float32)
    for k, (w, b) in enumerate(params):
        out_d, in_d = w.shape
        assert (out_d, in_d) == (dims[k + 1], dims[k])
        w_packed = w_packed.at[k, :out_d, :in_d].set(w.astype(jnp.bfloat16))
        b_packed = b_packed.at[k, :out_d, 0].set(b.astype(jnp.float32))
    return w_packed, b_packed, dims


def sparse_autoencoder_forward(x, packed, *, batch_tile=1024):
    """x: (B, n_channels) float32.  packed: output of pack_params()."""
    w_packed, b_packed, dims = packed
    B, C = x.shape
    assert C == dims[0] == dims[-1]

    # Batch tile: multiple of 128 (lane axis), clamped so tiny batches don't over-pad.
    tb = max(128, min(_round_up(batch_tile, 128), _round_up(B, 128)))
    bp = _round_up(B, tb)

    # One-time transpose to the lane-dense (features, batch) layout (outside hot path).
    x_t = jnp.transpose(x)                                # (C, B)
    if bp != B:
        x_t = jnp.pad(x_t, ((0, 0), (0, bp - B)))

    out_t = pl.pallas_call(
        functools.partial(_sae_kernel, dims=dims),
        out_shape=jax.ShapeDtypeStruct((C, bp), x.dtype),
        grid_spec=pltpu.PrefetchScalarGridSpec(
            num_scalar_prefetch=0,
            grid=(bp // tb,),
            in_specs=[
                pl.BlockSpec((C, tb), lambda i: (0, i)),            # tiled over batch
                pl.BlockSpec(w_packed.shape, lambda i: (0, 0, 0)),  # constant weights
                pl.BlockSpec(b_packed.shape, lambda i: (0, 0, 0)),  # constant biases
            ],
            out_specs=pl.BlockSpec((C, tb), lambda i: (0, i)),
        ),
        compiler_params=pltpu.CompilerParams(
            dimension_semantics=("parallel",)),           # batch steps shard across TCs
    )(x_t, w_packed, b_packed)

    return jnp.transpose(out_t[:, :B])                    # back to (B, C)


def init_params(n_channels, key):
    """nn.Linear-style U(-1/sqrt(in), 1/sqrt(in)) init, PyTorch-native (out, in) layout."""
    dims = (n_channels, 15, 10, 3, 10, 15, n_channels)
    params = []
    for i in range(len(dims) - 1):
        fan_in, fan_out = dims[i], dims[i + 1]
        key, kw, kb = jax.random.split(key, 3)
        bound = 1.0 / (fan_in ** 0.5)
        w = jax.random.uniform(kw, (fan_out, fan_in), jnp.float32, -bound, bound)
        b = jax.random.uniform(kb, (fan_out,), jnp.float32, -bound, bound)
        params.append((w, b))
    return params


def reference_forward(x, params):
    """Plain-JAX f32 reference matching the PyTorch forward."""
    h = x
    for (w, b) in params:
        h = jax.nn.sigmoid(h @ w.T + b)
    return h


if __name__ == "__main__":
    key = jax.random.PRNGKey(0)
    n_channels = 8
    batch = 8192            # default batch_tile=1024 -> grid of 8 pipelined steps

    k_x, k_p = jax.random.split(key)
    x = jax.random.normal(k_x, (batch, n_channels), jnp.float32)
    params = init_params(n_channels, k_p)
    packed = pack_params(params, n_channels)

    out = sparse_autoencoder_forward(x, packed)
    out = jax.block_until_ready(out)

    ref = reference_forward(x, params)
    assert out.shape == (batch, n_channels)
    max_err = float(jnp.max(jnp.abs(out - ref)))
    assert max_err < 3e-2, f"mismatch vs reference (max abs err {max_err})"

    print("KERNEL_OK")
</pallas_src>

<mosaic_0001>
module attributes {stable_mosaic.version = 11 : i64} {
  func.func @_sae_kernel(%arg0: i32, %arg1: memref<8x1024xf32, #tpu.memory_space<vmem>>, %arg2: memref<6x16x16xbf16, #tpu.memory_space<vmem>>, %arg3: memref<6x16x1xf32, #tpu.memory_space<vmem>>, %arg4: memref<8x1024xf32, #tpu.memory_space<vmem>>) attributes {dimension_semantics = [#tpu.dimension_semantics<parallel>], iteration_bounds = array<i64: 8>, scalar_prefetch = 0 : i64, scratch_operands = 0 : i64, tpu.core_type = #tpu.core_type<tc>, window_params = [{transform_indices = @transform_0, window_bounds = array<i64: 8, 1024>}, {pipeline_mode = #tpu.pipeline_mode<synchronous>, transform_indices = @transform_1, window_bounds = array<i64: 6, 16, 16>}, {pipeline_mode = #tpu.pipeline_mode<synchronous>, transform_indices = @transform_2, window_bounds = array<i64: 6, 16, 1>}, {transform_indices = @transform_3, window_bounds = array<i64: 8, 1024>}]} {
    %c0 = arith.constant 0 : index
    %c0_0 = arith.constant 0 : index
    %0 = vector.load %arg1[%c0, %c0_0] : memref<8x1024xf32, #tpu.memory_space<vmem>>, vector<8x1024xf32>
    %c0_1 = arith.constant 0 : index
    %c0_2 = arith.constant 0 : index
    %c0_3 = arith.constant 0 : index
    %1 = vector.load %arg2[%c0_1, %c0_2, %c0_3] : memref<6x16x16xbf16, #tpu.memory_space<vmem>>, vector<1x16x16xbf16>
    %2 = vector.shape_cast %1 : vector<1x16x16xbf16> to vector<16x16xbf16>
    %3 = vector.extract_strided_slice %2 {offsets = [0, 0], sizes = [16, 8], strides = [1, 1]} : vector<16x16xbf16> to vector<16x8xbf16>
    %4 = arith.truncf %0 : vector<8x1024xf32> to vector<8x1024xbf16>
    %cst = arith.constant dense<0.000000e+00> : vector<16x1024xf32>
    %5 = tpu.matmul %3, %4, %cst {dimension_numbers = #tpu.dot_dimension_numbers<[1], [0], [0], [1], [0, 0, 1, 1], [], []>} : vector<16x8xbf16>, vector<8x1024xbf16>, vector<16x1024xf32> -> vector<16x1024xf32>
    %c0_4 = arith.constant 0 : index
    %c0_5 = arith.constant 0 : index
    %c0_6 = arith.constant 0 : index
    %6 = vector.load %arg3[%c0_4, %c0_5, %c0_6] : memref<6x16x1xf32, #tpu.memory_space<vmem>>, vector<1x16x1xf32>
    %7 = vector.shape_cast %6 : vector<1x16x1xf32> to vector<16x1xf32>
    %8 = vector.broadcast %7 : vector<16x1xf32> to vector<16x1024xf32>
    %9 = arith.addf %5, %8 : vector<16x1024xf32>
    %cst_7 = arith.constant 0.000000e+00 : f32
    %10 = vector.broadcast %cst_7 : f32 to vector<16x1024xf32>
    %11 = arith.subf %10, %9 : vector<16x1024xf32>
    %12 = math.exp %11 : vector<16x1024xf32>
    %cst_8 = arith.constant 1.000000e+00 : f32
    %13 = vector.broadcast %cst_8 : f32 to vector<16x1024xf32>
    %14 = arith.addf %13, %12 : vector<16x1024xf32>
    %15 = tpu.reciprocal %14 {approx = true} : vector<16x1024xf32> -> vector<16x1024xf32>
    %c1 = arith.constant 1 : index
    %c0_9 = arith.constant 0 : index
    %c0_10 = arith.constant 0 : index
    %16 = vector.load %arg2[%c1, %c0_9, %c0_10] : memref<6x16x16xbf16, #tpu.memory_space<vmem>>, vector<1x16x16xbf16>
    %17 = vector.shape_cast %16 : vector<1x16x16xbf16> to vector<16x16xbf16>
    %18 = arith.truncf %15 : vector<16x1024xf32> to vector<16x1024xbf16>
    %cst_11 = arith.constant dense<0.000000e+00> : vector<16x1024xf32>
    %19 = tpu.matmul %17, %18, %cst_11 {dimension_numbers = #tpu.dot_dimension_numbers<[1], [0], [0], [1], [0, 0, 1, 1], [], []>} : vector<16x16xbf16>, vector<16x1024xbf16>, vector<16x1024xf32> -> vector<16x1024xf32>
    %c1_12 = arith.constant 1 : index
    %c0_13 = arith.constant 0 : index
    %c0_14 = arith.constant 0 : index
    %20 = vector.load %arg3[%c1_12, %c0_13, %c0_14] : memref<6x16x1xf32, #tpu.memory_space<vmem>>, vector<1x16x1xf32>
    %21 = vector.shape_cast %20 : vector<1x16x1xf32> to vector<16x1xf32>
    %22 = vector.broadcast %21 : vector<16x1xf32> to vector<16x1024xf32>
    %23 = arith.addf %19, %22 : vector<16x1024xf32>
    %cst_15 = arith.constant 0.000000e+00 : f32
    %24 = vector.broadcast %cst_15 : f32 to vector<16x1024xf32>
    %25 = arith.subf %24, %23 : vector<16x1024xf32>
    %26 = math.exp %25 : vector<16x1024xf32>
    %cst_16 = arith.constant 1.000000e+00 : f32
    %27 = vector.broadcast %cst_16 : f32 to vector<16x1024xf32>
    %28 = arith.addf %27, %26 : vector<16x1024xf32>
    %29 = tpu.reciprocal %28 {approx = true} : vector<16x1024xf32> -> vector<16x1024xf32>
    %c2 = arith.constant 2 : index
    %c0_17 = arith.constant 0 : index
    %c0_18 = arith.constant 0 : index
    %30 = vector.load %arg2[%c2, %c0_17, %c0_18] : memref<6x16x16xbf16, #tpu.memory_space<vmem>>, vector<1x16x16xbf16>
    %31 = vector.shape_cast %30 : vector<1x16x16xbf16> to vector<16x16xbf16>
    %32 = arith.truncf %29 : vector<16x1024xf32> to vector<16x1024xbf16>
    %cst_19 = arith.constant dense<0.000000e+00> : vector<16x1024xf32>
    %33 = tpu.matmul %31, %32, %cst_19 {dimension_numbers = #tpu.dot_dimension_numbers<[1], [0], [0], [1], [0, 0, 1, 1], [], []>} : vector<16x16xbf16>, vector<16x1024xbf16>, vector<16x1024xf32> -> vector<16x1024xf32>
    %c2_20 = arith.constant 2 : index
    %c0_21 = arith.constant 0 : index
    %c0_22 = arith.constant 0 : index
    %34 = vector.load %arg3[%c2_20, %c0_21, %c0_22] : memref<6x16x1xf32, #tpu.memory_space<vmem>>, vector<1x16x1xf32>
    %35 = vector.shape_cast %34 : vector<1x16x1xf32> to vector<16x1xf32>
    %36 = vector.broadcast %35 : vector<16x1xf32> to vector<16x1024xf32>
    %37 = arith.addf %33, %36 : vector<16x1024xf32>
    %cst_23 = arith.constant 0.000000e+00 : f32
    %38 = vector.broadcast %cst_23 : f32 to vector<16x1024xf32>
    %39 = arith.subf %38, %37 : vector<16x1024xf32>
    %40 = math.exp %39 : vector<16x1024xf32>
    %cst_24 = arith.constant 1.000000e+00 : f32
    %41 = vector.broadcast %cst_24 : f32 to vector<16x1024xf32>
    %42 = arith.addf %41, %40 : vector<16x1024xf32>
    %43 = tpu.reciprocal %42 {approx = true} : vector<16x1024xf32> -> vector<16x1024xf32>
    %c3 = arith.constant 3 : index
    %c0_25 = arith.constant 0 : index
    %c0_26 = arith.constant 0 : index
    %44 = vector.load %arg2[%c3, %c0_25, %c0_26] : memref<6x16x16xbf16, #tpu.memory_space<vmem>>, vector<1x16x16xbf16>
    %45 = vector.shape_cast %44 : vector<1x16x16xbf16> to vector<16x16xbf16>
    %46 = arith.truncf %43 : vector<16x1024xf32> to vector<16x1024xbf16>
    %cst_27 = arith.constant dense<0.000000e+00> : vector<16x1024xf32>
    %47 = tpu.matmul %45, %46, %cst_27 {dimension_numbers = #tpu.dot_dimension_numbers<[1], [0], [0], [1], [0, 0, 1, 1], [], []>} : vector<16x16xbf16>, vector<16x1024xbf16>, vector<16x1024xf32> -> vector<16x1024xf32>
    %c3_28 = arith.constant 3 : index
    %c0_29 = arith.constant 0 : index
    %c0_30 = arith.constant 0 : index
    %48 = vector.load %arg3[%c3_28, %c0_29, %c0_30] : memref<6x16x1xf32, #tpu.memory_space<vmem>>, vector<1x16x1xf32>
    %49 = vector.shape_cast %48 : vector<1x16x1xf32> to vector<16x1xf32>
    %50 = vector.broadcast %49 : vector<16x1xf32> to vector<16x1024xf32>
    %51 = arith.addf %47, %50 : vector<16x1024xf32>
    %cst_31 = arith.constant 0.000000e+00 : f32
    %52 = vector.broadcast %cst_31 : f32 to vector<16x1024xf32>
    %53 = arith.subf %52, %51 : vector<16x1024xf32>
    %54 = math.exp %53 : vector<16x1024xf32>
    %cst_32 = arith.constant 1.000000e+00 : f32
    %55 = vector.broadcast %cst_32 : f32 to vector<16x1024xf32>
    %56 = arith.addf %55, %54 : vector<16x1024xf32>
    %57 = tpu.reciprocal %56 {approx = true} : vector<16x1024xf32> -> vector<16x1024xf32>
    %c4 = arith.constant 4 : index
    %c0_33 = arith.constant 0 : index
    %c0_34 = arith.constant 0 : index
    %58 = vector.load %arg2[%c4, %c0_33, %c0_34] : memref<6x16x16xbf16, #tpu.memory_space<vmem>>, vector<1x16x16xbf16>
    %59 = vector.shape_cast %58 : vector<1x16x16xbf16> to vector<16x16xbf16>
    %60 = arith.truncf %57 : vector<16x1024xf32> to vector<16x1024xbf16>
    %cst_35 = arith.constant dense<0.000000e+00> : vector<16x1024xf32>
    %61 = tpu.matmul %59, %60, %cst_35 {dimension_numbers = #tpu.dot_dimension_numbers<[1], [0], [0], [1], [0, 0, 1, 1], [], []>} : vector<16x16xbf16>, vector<16x1024xbf16>, vector<16x1024xf32> -> vector<16x1024xf32>
    %c4_36 = arith.constant 4 : index
    %c0_37 = arith.constant 0 : index
    %c0_38 = arith.constant 0 : index
    %62 = vector.load %arg3[%c4_36, %c0_37, %c0_38] : memref<6x16x1xf32, #tpu.memory_space<vmem>>, vector<1x16x1xf32>
    %63 = vector.shape_cast %62 : vector<1x16x1xf32> to vector<16x1xf32>
    %64 = vector.broadcast %63 : vector<16x1xf32> to vector<16x1024xf32>
    %65 = arith.addf %61, %64 : vector<16x1024xf32>
    %cst_39 = arith.constant 0.000000e+00 : f32
    %66 = vector.broadcast %cst_39 : f32 to vector<16x1024xf32>
    %67 = arith.subf %66, %65 : vector<16x1024xf32>
    %68 = math.exp %67 : vector<16x1024xf32>
    %cst_40 = arith.constant 1.000000e+00 : f32
    %69 = vector.broadcast %cst_40 : f32 to vector<16x1024xf32>
    %70 = arith.addf %69, %68 : vector<16x1024xf32>
    %71 = tpu.reciprocal %70 {approx = true} : vector<16x1024xf32> -> vector<16x1024xf32>
    %c5 = arith.constant 5 : index
    %c0_41 = arith.constant 0 : index
    %c0_42 = arith.constant 0 : index
    %72 = vector.load %arg2[%c5, %c0_41, %c0_42] : memref<6x16x16xbf16, #tpu.memory_space<vmem>>, vector<1x16x16xbf16>
    %73 = vector.shape_cast %72 : vector<1x16x16xbf16> to vector<16x16xbf16>
    %74 = arith.truncf %71 : vector<16x1024xf32> to vector<16x1024xbf16>
    %cst_43 = arith.constant dense<0.000000e+00> : vector<16x1024xf32>
    %75 = tpu.matmul %73, %74, %cst_43 {dimension_numbers = #tpu.dot_dimension_numbers<[1], [0], [0], [1], [0, 0, 1, 1], [], []>} : vector<16x16xbf16>, vector<16x1024xbf16>, vector<16x1024xf32> -> vector<16x1024xf32>
    %c5_44 = arith.constant 5 : index
    %c0_45 = arith.constant 0 : index
    %c0_46 = arith.constant 0 : index
    %76 = vector.load %arg3[%c5_44, %c0_45, %c0_46] : memref<6x16x1xf32, #tpu.memory_space<vmem>>, vector<1x16x1xf32>
    %77 = vector.shape_cast %76 : vector<1x16x1xf32> to vector<16x1xf32>
    %78 = vector.broadcast %77 : vector<16x1xf32> to vector<16x1024xf32>
    %79 = arith.addf %75, %78 : vector<16x1024xf32>
    %cst_47 = arith.constant 0.000000e+00 : f32
    %80 = vector.broadcast %cst_47 : f32 to vector<16x1024xf32>
    %81 = arith.subf %80, %79 : vector<16x1024xf32>
    %82 = math.exp %81 : vector<16x1024xf32>
    %cst_48 = arith.constant 1.000000e+00 : f32
    %83 = vector.broadcast %cst_48 : f32 to vector<16x1024xf32>
    %84 = arith.addf %83, %82 : vector<16x1024xf32>
    %85 = tpu.reciprocal %84 {approx = true} : vector<16x1024xf32> -> vector<16x1024xf32>
    %86 = vector.extract_strided_slice %85 {offsets = [0, 0], sizes = [8, 1024], strides = [1, 1]} : vector<16x1024xf32> to vector<8x1024xf32>
    %c0_49 = arith.constant 0 : index
    %c0_50 = arith.constant 0 : index
    %87 = vector.load %arg4[%c0_49, %c0_50] : memref<8x1024xf32, #tpu.memory_space<vmem>>, vector<8x1024xf32>
    tpu.vector_store %arg4[%c0_49, %c0_50], %86 {strides = array<i32>} : memref<8x1024xf32, #tpu.memory_space<vmem>>, vector<8x1024xf32>,
    return
  }
  func.func @transform_0(%arg0: i32) -> (i32, i32) {
    %c0_i32 = arith.constant 0 : i32
    %c0_i32_0 = arith.constant 0 : i32
    return %c0_i32, %arg0 : i32, i32
  }
  func.func @transform_1(%arg0: i32) -> (i32, i32, i32) {
    %c0_i32 = arith.constant 0 : i32
    %c0_i32_0 = arith.constant 0 : i32
    %c0_i32_1 = arith.constant 0 : i32
    %c0_i32_2 = arith.constant 0 : i32
    return %c0_i32, %c0_i32_0, %c0_i32_1 : i32, i32, i32
  }
  func.func @transform_2(%arg0: i32) -> (i32, i32, i32) {
    %c0_i32 = arith.constant 0 : i32
    %c0_i32_0 = arith.constant 0 : i32
    %c0_i32_1 = arith.constant 0 : i32
    %c0_i32_2 = arith.constant 0 : i32
    return %c0_i32, %c0_i32_0, %c0_i32_1 : i32, i32, i32
  }
  func.func @transform_3(%arg0: i32) -> (i32, i32) {
    %c0_i32 = arith.constant 0 : i32
    %c0_i32_0 = arith.constant 0 : i32
    return %c0_i32, %arg0 : i32, i32
  }
}

</mosaic_0001>

<llo_original>
// kernel: tpu_custom_call.1
$region0: #{tpu_custom_call.1}
  #allocation0 [shape = 'u32[]', space=smem, size = 0x4, offset = 0x4, fixed_abs, tag = 'smem constant byte address 0x4 - core index']
  #allocation1 [shape = 'u32[144,128]{1,0:T(1,128)}', space=vmem, size = 0x12000, scoped, tag = 'internal scratch']
  %s0 = inlined_call_operand.hbm [shape: f32[8,8192], index: 0, kind: input, shape index: {}]
  %s1 = inlined_call_operand.vmem [shape: bf16[6,16,16], index: 1, kind: input, shape index: {}]
  %s2 = inlined_call_operand.vmem [shape: f32[6,16,1], index: 2, kind: input, shape index: {}]
  %s3 = inlined_call_operand.hbm [shape: f32[8,8192], index: 3, kind: output, shape index: {}]
  %s4 = sld [smem:[#allocation0]]
  $region49: #{tpu_custom_call.1} parent=0
    _
  %s6 = ssub.s32 1, %s4
  %s7 = scalar_select 0, %s6, %s4
  $region1: #{tpu_custom_call.1} parent=0
    #allocation2 [shape = 'u8[65536]{0}', space=vmem, size = 0x10000, scoped, tag = 'input window, operand 0']
    #allocation3 [shape = 's32[2]{0}', space=sflag, size = 0x8, scoped, tag = 'scoped memory for tpu_custom_call.1']
    #allocation4 [shape = 's32[2]{0}', space=sflag, size = 0x8, scoped, tag = 'scoped memory for tpu_custom_call.1']
    #allocation5 [shape = 'u8[65536]{0}', space=vmem, size = 0x10000, scoped, tag = 'output window, operand 0']
    %8 = vsyncpa [#allocation3], 0
    %s9 = scalar_lea.sflag [#allocation3], 1
    %10 = vsyncpa %s9, 0
    %11 = vsyncpa [#allocation4], 0
    %s12 = scalar_lea.sflag [#allocation4], 1
    %13 = vsyncpa %s12, 0
    loop: start=0, step=1, limit=10
    $region2: #{tpu_custom_call.1} parent=1 // loop_pre_header
      _
    $region3: #{tpu_custom_call.1} parent=1 // loop_header
      %s15 = sphi 0, %s19
      %p16 = scmp.ge.s32.totalorder %s15, 10
      %s25 = sphi 0, %s27
      %s28 = sphi 0, %s25
      %s29 = sphi 0, %s28
      %s45 = sphi 0, %s29
      %s49 = sphi 0, %s49
      %s51 = sphi 0, %s49
      %s52 = sphi 0, %s51
      %s66 = sphi 0, %s52
      %s70 = sphi 0, %s70
      %s72 = sphi 0, %s70
      %s73 = sphi 0, %s72
      %s87 = sphi 0, %s73
      %s93 = sphi 0, %s95
      %s96 = sphi 0, %s93
      %s97 = sphi 0, %s96
      %s113 = sphi 0, %s97
    $region4: #{tpu_custom_call.1} parent=1 // loop_header_branch
      %18 = sbr.rel (%p16) target = $region8
    $region5: #{tpu_custom_call.1} parent=1 // loop_body
      %s20 = ssub.s32 %s15, 1
      %s21 = ssub.s32 %s15, 2
      %s22 = sadd.s32 %s15, 1
      %s23 = ssub.s32 %s15, %s22
      %p24 = scmp.eq.s32.totalorder %s23, 0
      %s26 = sadd.s32 %s25, 1
      %s27 = scalar_select %p24, %s25, %s26
      %p30 = pneg %p24
      %p31 = scmp.eq.s32.totalorder %s15, 7
      %p32 = por %p30, %p31
      %p33 = scmp.ne.s32.totalorder %s25, %s28
      %p34 = scmp.eq.s32.totalorder %s15, 0
      %p35 = por %p33, %p34
      %p36 = scmp.ne.s32.totalorder %s25, %s28
      %p37 = scmp.eq.s32.totalorder %s20, 7
      %p38 = por %p36, %p37
      %p39 = scmp.ne.s32.totalorder %s28, %s29
      %p40 = scmp.eq.s32.totalorder %s20, 0
      %p41 = por %p39, %p40
      %p42 = scmp.ne.s32.totalorder %s28, %s29
      %p43 = scmp.eq.s32.totalorder %s21, 7
      %p44 = por %p42, %p43
      %p46 = scmp.ne.s32.totalorder %s29, %s45
      %p47 = scmp.eq.s32.totalorder %s21, 0
      %p48 = por %p46, %p47
      %s50 = sadd.s32 %s49, 1
      %p53 = scmp.eq.s32.totalorder %s15, 7
      %p54 = scmp.ne.s32.totalorder %s49, %s51
      %p55 = scmp.eq.s32.totalorder %s15, 0
      %p56 = por %p54, %p55
      %p57 = scmp.ne.s32.totalorder %s49, %s51
      %p58 = scmp.eq.s32.totalorder %s20, 7
      %p59 = por %p57, %p58
      %p60 = scmp.ne.s32.totalorder %s51, %s52
      %p61 = scmp.eq.s32.totalorder %s20, 0
      %p62 = por %p60, %p61
      %p63 = scmp.ne.s32.totalorder %s51, %s52
      %p64 = scmp.eq.s32.totalorder %s21, 7
      %p65 = por %p63, %p64
      %p67 = scmp.ne.s32.totalorder %s52, %s66
      %p68 = scmp.eq.s32.totalorder %s21, 0
      %p69 = por %p67, %p68
      %s71 = sadd.s32 %s70, 1
      %p74 = scmp.eq.s32.totalorder %s15, 7
      %p75 = scmp.ne.s32.totalorder %s70, %s72
      %p76 = scmp.eq.s32.totalorder %s15, 0
      %p77 = por %p75, %p76
      %p78 = scmp.ne.s32.totalorder %s70, %s72
      %p79 = scmp.eq.s32.totalorder %s20, 7
      %p80 = por %p78, %p79
      %p81 = scmp.ne.s32.totalorder %s72, %s73
      %p82 = scmp.eq.s32.totalorder %s20, 0
      %p83 = por %p81, %p82
      %p84 = scmp.ne.s32.totalorder %s72, %s73
      %p85 = scmp.eq.s32.totalorder %s21, 7
      %p86 = por %p84, %p85
      %p88 = scmp.ne.s32.totalorder %s73, %s87
      %p89 = scmp.eq.s32.totalorder %s21, 0
      %p90 = por %p88, %p89
      %s91 = ssub.s32 %s15, %s22
      %p92 = scmp.eq.s32.totalorder %s91, 0
      %s94 = sadd.s32 %s93, 1
      %s95 = scalar_select %p92, %s93, %s94
      %p98 = pneg %p92
      %p99 = scmp.eq.s32.totalorder %s15, 7
      %p100 = por %p98, %p99
      %p101 = scmp.ne.s32.totalorder %s93, %s96
      %p102 = scmp.eq.s32.totalorder %s15, 0
      %p103 = por %p101, %p102
      %p104 = scmp.ne.s32.totalorder %s93, %s96
      %p105 = scmp.eq.s32.totalorder %s20, 7
      %p106 = por %p104, %p105
      %p107 = scmp.ne.s32.totalorder %s96, %s97
      %p108 = scmp.eq.s32.totalorder %s20, 0
      %p109 = por %p107, %p108
      %p110 = scmp.ne.s32.totalorder %s96, %s97
      %p111 = scmp.eq.s32.totalorder %s21, 7
      %p112 = por %p110, %p111
      %p114 = scmp.ne.s32.totalorder %s97, %s113
      %p115 = scmp.eq.s32.totalorder %s21, 0
      %p116 = por %p114, %p115
      %p117 = scmp.le.s32.totalorder 1, %s15
      %p118 = scmp.lt.s32.totalorder %s15, 9
      %p119 = pnand %p117, %p118
      %p120 = pneg %p119
      // Predicated region
      $region9: #{tpu_custom_call.1} parent=5 // pred_check
        _
      $region10: #{tpu_custom_call.1} parent=5 // pred_check_branch
        %122 = sbr.rel (%p119) target = $region12
      $region11: #{tpu_custom_call.1} parent=5 // pred_region
        %s123 = ssub.s32 %s15, 1
        // Predicated region
        $region13: #{tpu_custom_call.1} parent=11 // pred_check
          %p124 = pneg %p62
        $region14: #{tpu_custom_call.1} parent=11 // pred_check_branch
          %126 = sbr.rel (%p124) target = $region16
        $region15: #{tpu_custom_call.1} parent=11 // pred_region
          _
        $region16: #{tpu_custom_call.1} parent=11 // pred_fallthru
          _
        // Predicated region
        $region17: #{tpu_custom_call.1} parent=11 // pred_check
          %p127 = pneg %p83
        $region18: #{tpu_custom_call.1} parent=11 // pred_check_branch
          %129 = sbr.rel (%p127) target = $region20
        $region19: #{tpu_custom_call.1} parent=11 // pred_region
          _
        $region20: #{tpu_custom_call.1} parent=11 // pred_fallthru
          _
      $region12: #{tpu_custom_call.1} parent=5 // pred_fallthru
        _
      %p130 = scmp.lt.s32.totalorder %s15, 8
      // Predicated region
      $region21: #{tpu_custom_call.1} parent=5 // pred_check
        %p131 = pneg %p130
      $region22: #{tpu_custom_call.1} parent=5 // pred_check_branch
        %133 = sbr.rel (%p131) target = $region24
      $region23: #{tpu_custom_call.1} parent=5 // pred_region
        // Predicated region
        $region25: #{tpu_custom_call.1} parent=23 // pred_check
          %p134 = pneg %p35
        $region26: #{tpu_custom_call.1} parent=23 // pred_check_branch
          %136 = sbr.rel (%p134) target = $region28
        $region27: #{tpu_custom_call.1} parent=23 // pred_region
          %s137 = sand.u32 %s25, 1
          %s138 = scalar_lea.sflag [#allocation3], %s137
          %s139 = sand.u32 %s25, 1
          %s140 = smul.addr %s139, 64
          %s141 = scalar_lea.vmem [#allocation2], %s140
          %s142 = smul.u32 8, %s15
          %s144 = ssub.s32 1024, 1024
          %145 = vsyncadd %s138, %s144
          %s146 = smul.addr %s142, 128
          %s147 = scalar_lea.hbm %s0, %s146
          %s149 = sshll.u32 %s141, 4
          %s150 = int_to_ptr.vmem [resolvable:$true] %s149
          %152 = dma.hbm_to_vmem [thread:$0]  %s147, 1024, %s150, %s138
        $region28: #{tpu_custom_call.1} parent=23 // pred_fallthru
          _
      $region24: #{tpu_custom_call.1} parent=5 // pred_fallthru
        _
      %p153 = scmp.le.s32.totalorder 1, %s15
      %p154 = scmp.lt.s32.totalorder %s15, 9
      %p155 = pnand %p153, %p154
      %p156 = pneg %p155
      // Predicated region
      $region29: #{tpu_custom_call.1} parent=5 // pred_check
        _
      $region30: #{tpu_custom_call.1} parent=5 // pred_check_branch
        %158 = sbr.rel (%p155) target = $region32
      $region31: #{tpu_custom_call.1} parent=5 // pred_region
        %s159 = ssub.s32 %s15, 1
        %s160 = sand.u32 %s28, 1
        %s161 = scalar_lea.sflag [#allocation3], %s160
        %s162 = sand.u32 %s28, 1
        %s163 = smul.addr %s162, 64
        %s164 = scalar_lea.vmem [#allocation2], %s163
        // Predicated region
        $region33: #{tpu_custom_call.1} parent=31 // pred_check
          %p165 = pneg %p41
        $region34: #{tpu_custom_call.1} parent=31 // pred_check_branch
          %167 = sbr.rel (%p165) target = $region36
        $region35: #{tpu_custom_call.1} parent=31 // pred_region
          %168 = dma.done %s161, 1024
        $region36: #{tpu_custom_call.1} parent=31 // pred_fallthru
          _
        %s169 = sand.u32 %s28, 1
        %s170 = scalar_lea.sflag [#allocation3], %s169
        %s171 = sand.u32 %s28, 1
        %s172 = smul.addr %s171, 64
        %s173 = scalar_lea.vmem [#allocation2], %s172
        %p174 = pneg %p41
        %p175 = pneg %p38
        %p176 = pneg %p62
        %p177 = pneg %p59
        %p178 = pneg %p83
        %p179 = pneg %p80
        %p180 = pneg %p109
        %p181 = pneg %p106
        %s182 = sand.u32 %s96, 1
        %s183 = scalar_lea.sflag [#allocation4], %s182
        %s184 = sand.u32 %s96, 1
        %s185 = smul.addr %s184, 64
        %s186 = scalar_lea.vmem [#allocation5], %s185
        %s187 = smul.u32 8, %s20
        %s188 = smul.u32 8, %s20
        %v190 = vld [vmem:[%s164] sm:$0xff]
        %v191 = vld [vmem:[%s164 + $0x8] sm:$0xff]
        %v192 = vld [vmem:[%s164 + $0x10] sm:$0xff]
        %v193 = vld [vmem:[%s164 + $0x18] sm:$0xff]
        %v194 = vld [vmem:[%s164 + $0x20] sm:$0xff]
        %v195 = vld [vmem:[%s164 + $0x28] sm:$0xff]
        %v196 = vld [vmem:[%s164 + $0x30] sm:$0xff]
        %v197 = vld [vmem:[%s164 + $0x38] sm:$0xff]
        %v198 = vld [vmem:[%s1] sm:$0xf]
        %v199 = vld [vmem:[%s1 + $0x4] sm:$0xf]
        %v200 = vpack.c.bf16 %v190, %v190
        %v201 = vpack.c.bf16 %v191, %v191
        %v202 = vpack.c.bf16 %v192, %v192
        %v203 = vpack.c.bf16 %v193, %v193
        %v204 = vpack.c.bf16 %v194, %v194
        %v205 = vpack.c.bf16 %v195, %v195
        %v206 = vpack.c.bf16 %v196, %v196
        %v207 = vpack.c.bf16 %v197, %v197
        %v208 = vld [vmem:[%s2] sm:$0xff]
        %v209 = vld [vmem:[%s2 + $0x8] sm:$0xff]
        %211 = vset.pattern.permute.xlu0 0
        %212 = vperm.xlu0 %211, %v208
        %v213 = vpop.permute.xlu0 %212
        %216 = vset.pattern.permute.xlu0 0
        %217 = vperm.xlu0 %216, %v209
        %v218 = vpop.permute.xlu0 %217
        %v222 = vunpack.c.l.b16 %v198
        %v223 = vunpack.c.l.b16 %v199
        %v224 = vpack.c.b16 %v223, %v222
        %vm225 = vcmask 64512
        %v227 = vsel %vm225, %v224, 0
        %vm229 = vcmask 1043456
        %v231 = vsel %vm229, %v200, 0
        %v234 = vsel %vm229, %v201, 0
        %v237 = vsel %vm229, %v202, 0
        %v240 = vsel %vm229, %v203, 0
        %v243 = vsel %vm229, %v204, 0
        %v246 = vsel %vm229, %v205, 0
        %v249 = vsel %vm229, %v206, 0
        %v252 = vsel %vm229, %v207, 0
        %254 = vmatprep.subr.bf16.mxu0 %v234
        %255 = vmatpush1.bf16.msra.mxu0 %v231
        %256 = vmatprep.subr.bf16.mxu0 0
        %257 = vmatpush1.bf16.msra.mxu0 0
        %258 = vmatprep.subr.bf16.mxu0 0
        %259 = vmatpush1.bf16.msra.mxu0 0
        %260 = vmatprep.subr.bf16.mxu0 0
        %261 = vmatpush1.bf16.msra.mxu0 0
        %262 = vmatprep.subr.bf16.mxu0 0
        %263 = vmatpush1.bf16.msra.mxu0 0
        %264 = vmatprep.subr.bf16.mxu0 0
        %265 = vmatpush1.bf16.msra.mxu0 0
        %266 = vmatprep.subr.bf16.mxu0 0
        %267 = vmatpush1.bf16.msra.mxu0 0
        %268 = vmatprep.subr.bf16.mxu0 0
        %269 = vmatpush1.bf16.msra.mxu0 0
        %270 = vmatprep.subr.bf16.mxu0 0
        %271 = vmatpush1.bf16.msra.mxu0 0
        %272 = vmatprep.subr.bf16.mxu0 0
        %273 = vmatpush1.bf16.msra.mxu0 0
        %274 = vmatprep.subr.bf16.mxu0 0
        %275 = vmatpush1.bf16.msra.mxu0 0
        %276 = vmatprep.subr.bf16.mxu0 0
        %277 = vmatpush1.bf16.msra.mxu0 0
        %278 = vmatprep.subr.bf16.mxu0 0
        %279 = vmatpush1.bf16.msra.mxu0 0
        %280 = vmatprep.subr.bf16.mxu0 0
        %281 = vmatpush1.bf16.msra.mxu0 0
        %282 = vmatprep.subr.bf16.mxu0 0
        %283 = vmatpush1.bf16.msra.mxu0 0
        %284 = vmatprep.subr.bf16.mxu0 0
        %285 = vmatpush1.bf16.msra.mxu0 0
        %286 = vmatprep.mubr.bf16.mxu0 0
        %287 = vmatmul.mubr.bf16.gmra.mrb[0].mxu0 %v227
        %v288 = vpop.f32.mrb[0].mxu0
        %v289 = vadd.f32 %v213, %v288
        %v290 = vpop.f32.mrb[0].mxu0
        %v291 = vadd.f32 %v213, %v290
        %v292 = vpop.f32.mrb[0].mxu0
        %v293 = vadd.f32 %v218, %v292
        %v294 = vpop.f32.mrb[0].mxu0
        %v295 = vadd.f32 %v218, %v294
        %296 = vdwg.mxu0
        %297 = vmatprep.subr.bf16.mxu0 %v240
        %298 = vmatpush1.bf16.msra.mxu0 %v237
        %299 = vmatprep.subr.bf16.mxu0 0
        %300 = vmatpush1.bf16.msra.mxu0 0
        %301 = vmatprep.subr.bf16.mxu0 0
        %302 = vmatpush1.bf16.msra.mxu0 0
        %303 = vmatprep.subr.bf16.mxu0 0
        %304 = vmatpush1.bf16.msra.mxu0 0
        %305 = vmatprep.subr.bf16.mxu0 0
        %306 = vmatpush1.bf16.msra.mxu0 0
        %307 = vmatprep.subr.bf16.mxu0 0
        %308 = vmatpush1.bf16.msra.mxu0 0
        %309 = vmatprep.subr.bf16.mxu0 0
        %310 = vmatpush1.bf16.msra.mxu0 0
        %311 = vmatprep.subr.bf16.mxu0 0
        %312 = vmatpush1.bf16.msra.mxu0 0
        %313 = vmatprep.subr.bf16.mxu0 0
        %314 = vmatpush1.bf16.msra.mxu0 0
        %315 = vmatprep.subr.bf16.mxu0 0
        %316 = vmatpush1.bf16.msra.mxu0 0
        %317 = vmatprep.subr.bf16.mxu0 0
        %318 = vmatpush1.bf16.msra.mxu0 0
        %319 = vmatprep.subr.bf16.mxu0 0
        %320 = vmatpush1.bf16.msra.mxu0 0
        %321 = vmatprep.subr.bf16.mxu0 0
        %322 = vmatpush1.bf16.msra.mxu0 0
        %323 = vmatprep.subr.bf16.mxu0 0
        %324 = vmatpush1.bf16.msra.mxu0 0
        %325 = vmatprep.subr.bf16.mxu0 0
        %326 = vmatpush1.bf16.msra.mxu0 0
        %327 = vmatprep.subr.bf16.mxu0 0
        %328 = vmatpush1.bf16.msra.mxu0 0
        %329 = vmatprep.mubr.bf16.mxu0 0
        %330 = vmatmul.mubr.bf16.gmra.mrb[0].mxu0 %v227
        %v331 = vpop.f32.mrb[0].mxu0
        %v332 = vadd.f32 %v213, %v331
        %v333 = vpop.f32.mrb[0].mxu0
        %v334 = vadd.f32 %v213, %v333
        %v335 = vpop.f32.mrb[0].mxu0
        %v336 = vadd.f32 %v218, %v335
        %v337 = vpop.f32.mrb[0].mxu0
        %v338 = vadd.f32 %v218, %v337
        %339 = vdwg.mxu0
        %340 = vmatprep.subr.bf16.mxu0 %v246
        %341 = vmatpush1.bf16.msra.mxu0 %v243
        %342 = vmatprep.subr.bf16.mxu0 0
        %343 = vmatpush1.bf16.msra.mxu0 0
        %344 = vmatprep.subr.bf16.mxu0 0
        %345 = vmatpush1.bf16.msra.mxu0 0
        %346 = vmatprep.subr.bf16.mxu0 0
        %347 = vmatpush1.bf16.msra.mxu0 0
        %348 = vmatprep.subr.bf16.mxu0 0
        %349 = vmatpush1.bf16.msra.mxu0 0
        %350 = vmatprep.subr.bf16.mxu0 0
        %351 = vmatpush1.bf16.msra.mxu0 0
        %352 = vmatprep.subr.bf16.mxu0 0
        %353 = vmatpush1.bf16.msra.mxu0 0
        %354 = vmatprep.subr.bf16.mxu0 0
        %355 = vmatpush1.bf16.msra.mxu0 0
        %356 = vmatprep.subr.bf16.mxu0 0
        %357 = vmatpush1.bf16.msra.mxu0 0
        %358 = vmatprep.subr.bf16.mxu0 0
        %359 = vmatpush1.bf16.msra.mxu0 0
        %360 = vmatprep.subr.bf16.mxu0 0
        %361 = vmatpush1.bf16.msra.mxu0 0
        %362 = vmatprep.subr.bf16.mxu0 0
        %363 = vmatpush1.bf16.msra.mxu0 0
        %364 = vmatprep.subr.bf16.mxu0 0
        %365 = vmatpush1.bf16.msra.mxu0 0
        %366 = vmatprep.subr.bf16.mxu0 0
        %367 = vmatpush1.bf16.msra.mxu0 0
        %368 = vmatprep.subr.bf16.mxu0 0
        %369 = vmatpush1.bf16.msra.mxu0 0
        %370 = vmatprep.subr.bf16.mxu0 0
        %371 = vmatpush1.bf16.msra.mxu0 0
        %372 = vmatprep.mubr.bf16.mxu0 0
        %373 = vmatmul.mubr.bf16.gmra.mrb[0].mxu0 %v227
        %v374 = vpop.f32.mrb[0].mxu0
        %v375 = vadd.f32 %v213, %v374
        %v376 = vpop.f32.mrb[0].mxu0
        %v377 = vadd.f32 %v213, %v376
        %v378 = vpop.f32.mrb[0].mxu0
        %v379 = vadd.f32 %v218, %v378
        %v380 = vpop.f32.mrb[0].mxu0
        %v381 = vadd.f32 %v218, %v380
        %382 = vdwg.mxu0
        %383 = vmatprep.subr.bf16.mxu0 %v252
        %384 = vmatpush1.bf16.msra.mxu0 %v249
        %385 = vmatprep.subr.bf16.mxu0 0
        %386 = vmatpush1.bf16.msra.mxu0 0
        %387 = vmatprep.subr.bf16.mxu0 0
        %388 = vmatpush1.bf16.msra.mxu0 0
        %389 = vmatprep.subr.bf16.mxu0 0
        %390 = vmatpush1.bf16.msra.mxu0 0
        %391 = vmatprep.subr.bf16.mxu0 0
        %392 = vmatpush1.bf16.msra.mxu0 0
        %393 = vmatprep.subr.bf16.mxu0 0
        %394 = vmatpush1.bf16.msra.mxu0 0
        %395 = vmatprep.subr.bf16.mxu0 0
        %396 = vmatpush1.bf16.msra.mxu0 0
        %397 = vmatprep.subr.bf16.mxu0 0
        %398 = vmatpush1.bf16.msra.mxu0 0
        %399 = vmatprep.subr.bf16.mxu0 0
        %400 = vmatpush1.bf16.msra.mxu0 0
        %401 = vmatprep.subr.bf16.mxu0 0
        %402 = vmatpush1.bf16.msra.mxu0 0
        %403 = vmatprep.subr.bf16.mxu0 0
        %404 = vmatpush1.bf16.msra.mxu0 0
        %405 = vmatprep.subr.bf16.mxu0 0
        %406 = vmatpush1.bf16.msra.mxu0 0
        %407 = vmatprep.subr.bf16.mxu0 0
        %408 = vmatpush1.bf16.msra.mxu0 0
        %409 = vmatprep.subr.bf16.mxu0 0
        %410 = vmatpush1.bf16.msra.mxu0 0
        %411 = vmatprep.subr.bf16.mxu0 0
        %412 = vmatpush1.bf16.msra.mxu0 0
        %413 = vmatprep.subr.bf16.mxu0 0
        %414 = vmatpush1.bf16.msra.mxu0 0
        %415 = vmatprep.mubr.bf16.mxu0 0
        %416 = vmatmul.mubr.bf16.gmra.mrb[0].mxu0 %v227
        %v417 = vpop.f32.mrb[0].mxu0
        %v418 = vadd.f32 %v213, %v417
        %v419 = vpop.f32.mrb[0].mxu0
        %v420 = vadd.f32 %v213, %v419
        %v421 = vpop.f32.mrb[0].mxu0
        %v422 = vadd.f32 %v218, %v421
        %v423 = vpop.f32.mrb[0].mxu0
        %v424 = vadd.f32 %v218, %v423
        %425 = vdwg.mxu0
        %v426 = vsub.f32 0.0, %v289
        %v427 = vsub.f32 0.0, %v291
        %v428 = vsub.f32 0.0, %v332
        %v429 = vsub.f32 0.0, %v334
        %v430 = vsub.f32 0.0, %v375
        %v431 = vsub.f32 0.0, %v377
        %v432 = vsub.f32 0.0, %v418
        %v433 = vsub.f32 0.0, %v420
        %v434 = vsub.f32 0.0, %v293
        %v435 = vsub.f32 0.0, %v295
        %v436 = vsub.f32 0.0, %v336
        %v437 = vsub.f32 0.0, %v338
        %v438 = vsub.f32 0.0, %v379
        %v439 = vsub.f32 0.0, %v381
        %v440 = vsub.f32 0.0, %v422
        %v441 = vsub.f32 0.0, %v424
        %v442 = vmul.f32 %v426, 1.442695
        %v443 = vpow.pop %v442
        %v444 = vmul.f32 %v427, 1.442695
        %v445 = vpow.pop %v444
        %v446 = vmul.f32 %v428, 1.442695
        %v447 = vpow.pop %v446
        %v448 = vmul.f32 %v429, 1.442695
        %v449 = vpow.pop %v448
        %v450 = vmul.f32 %v430, 1.442695
        %v451 = vpow.pop %v450
        %v452 = vmul.f32 %v431, 1.442695
        %v453 = vpow.pop %v452
        %v454 = vmul.f32 %v432, 1.442695
        %v455 = vpow.pop %v454
        %v456 = vmul.f32 %v433, 1.442695
        %v457 = vpow.pop %v456
        %v458 = vmul.f32 %v434, 1.442695
        %v459 = vpow.pop %v458
        %v460 = vmul.f32 %v435, 1.442695
        %v461 = vpow.pop %v460
        %v462 = vmul.f32 %v436, 1.442695
        %v463 = vpow.pop %v462
        %v464 = vmul.f32 %v437, 1.442695
        %v465 = vpow.pop %v464
        %v466 = vmul.f32 %v438, 1.442695
        %v467 = vpow.pop %v466
        %v468 = vmul.f32 %v439, 1.442695
        %v469 = vpow.pop %v468
        %v470 = vmul.f32 %v440, 1.442695
        %v471 = vpow.pop %v470
        %v472 = vmul.f32 %v441, 1.442695
        %v473 = vpow.pop %v472
        %v474 = vadd.f32 %v443, 1.0
        %v475 = vadd.f32 %v445, 1.0
        %v476 = vadd.f32 %v447, 1.0
        %v477 = vadd.f32 %v449, 1.0
        %v478 = vadd.f32 %v451, 1.0
        %v479 = vadd.f32 %v453, 1.0
        %v480 = vadd.f32 %v455, 1.0
        %v481 = vadd.f32 %v457, 1.0
        %v482 = vadd.f32 %v459, 1.0
        %v483 = vadd.f32 %v461, 1.0
        %v484 = vadd.f32 %v463, 1.0
        %v485 = vadd.f32 %v465, 1.0
        %v486 = vadd.f32 %v467, 1.0
        %v487 = vadd.f32 %v469, 1.0
        %v488 = vadd.f32 %v471, 1.0
        %v489 = vadd.f32 %v473, 1.0
        %v490 = vrcp.pop %v474
        %v491 = vrcp.pop %v475
        %v492 = vrcp.pop %v476
        %v493 = vrcp.pop %v477
        %v494 = vrcp.pop %v478
        %v495 = vrcp.pop %v479
        %v496 = vrcp.pop %v480
        %v497 = vrcp.pop %v481
        %v498 = vrcp.pop %v482
        %v499 = vrcp.pop %v483
        %v500 = vrcp.pop %v484
        %v501 = vrcp.pop %v485
        %v502 = vrcp.pop %v486
        %v503 = vrcp.pop %v487
        %v504 = vrcp.pop %v488
        %v505 = vrcp.pop %v489
        %s506 = scalar_lea.vmem %s1, 8
        %v507 = vld [vmem:[%s506] sm:$0xf]
        %v508 = vld [vmem:[%s506 + $0x4] sm:$0xf]
        %v509 = vpack.c.bf16 %v498, %v490
        %v510 = vpack.c.bf16 %v499, %v491
        %v511 = vpack.c.bf16 %v500, %v492
        %v512 = vpack.c.bf16 %v501, %v493
        %v513 = vpack.c.bf16 %v502, %v494
        %v514 = vpack.c.bf16 %v503, %v495
        %v515 = vpack.c.bf16 %v504, %v496
        %v516 = vpack.c.bf16 %v505, %v497
        %s517 = scalar_lea.vmem %s2, 16
        %v518 = vld [vmem:[%s517] sm:$0xff]
        %v519 = vld [vmem:[%s517 + $0x8] sm:$0xff]
        %521 = vset.pattern.permute.xlu0 0
        %522 = vperm.xlu0 %521, %v518
        %v523 = vpop.permute.xlu0 %522
        %526 = vset.pattern.permute.xlu0 0
        %527 = vperm.xlu0 %526, %v519
        %v528 = vpop.permute.xlu0 %527
        %v532 = vunpack.c.l.b16 %v507
        %v533 = vunpack.c.l.b16 %v508
        %v534 = vpack.c.b16 %v533, %v532
        %vm535 = vcmask 130048
        %v537 = vsel %vm535, %v534, 0
        %539 = vmatprep.subr.bf16.mxu0 %v510
        %540 = vmatpush1.bf16.msra.mxu0 %v509
        %541 = vmatprep.subr.bf16.mxu0 0
        %542 = vmatpush1.bf16.msra.mxu0 0
        %543 = vmatprep.subr.bf16.mxu0 0
        %544 = vmatpush1.bf16.msra.mxu0 0
        %545 = vmatprep.subr.bf16.mxu0 0
        %546 = vmatpush1.bf16.msra.mxu0 0
        %547 = vmatprep.subr.bf16.mxu0 0
        %548 = vmatpush1.bf16.msra.mxu0 0
        %549 = vmatprep.subr.bf16.mxu0 0
        %550 = vmatpush1.bf16.msra.mxu0 0
        %551 = vmatprep.subr.bf16.mxu0 0
        %552 = vmatpush1.bf16.msra.mxu0 0
        %553 = vmatprep.subr.bf16.mxu0 0
        %554 = vmatpush1.bf16.msra.mxu0 0
        %555 = vmatprep.subr.bf16.mxu0 0
        %556 = vmatpush1.bf16.msra.mxu0 0
        %557 = vmatprep.subr.bf16.mxu0 0
        %558 = vmatpush1.bf16.msra.mxu0 0
        %559 = vmatprep.subr.bf16.mxu0 0
        %560 = vmatpush1.bf16.msra.mxu0 0
        %561 = vmatprep.subr.bf16.mxu0 0
        %562 = vmatpush1.bf16.msra.mxu0 0
        %563 = vmatprep.subr.bf16.mxu0 0
        %564 = vmatpush1.bf16.msra.mxu0 0
        %565 = vmatprep.subr.bf16.mxu0 0
        %566 = vmatpush1.bf16.msra.mxu0 0
        %567 = vmatprep.subr.bf16.mxu0 0
        %568 = vmatpush1.bf16.msra.mxu0 0
        %569 = vmatprep.subr.bf16.mxu0 0
        %570 = vmatpush1.bf16.msra.mxu0 0
        %571 = vmatprep.mubr.bf16.mxu0 0
        %572 = vmatmul.mubr.bf16.gmra.mrb[0].mxu0 %v537
        %v573 = vpop.f32.mrb[0].mxu0
        %v574 = vadd.f32 %v523, %v573
        %v575 = vpop.f32.mrb[0].mxu0
        %v576 = vadd.f32 %v523, %v575
        %v577 = vpop.f32.mrb[0].mxu0
        %v578 = vadd.f32 %v528, %v577
        %v579 = vpop.f32.mrb[0].mxu0
        %v580 = vadd.f32 %v528, %v579
        %581 = vdwg.mxu0
        %582 = vmatprep.subr.bf16.mxu0 %v512
        %583 = vmatpush1.bf16.msra.mxu0 %v511
        %584 = vmatprep.subr.bf16.mxu0 0
        %585 = vmatpush1.bf16.msra.mxu0 0
        %586 = vmatprep.subr.bf16.mxu0 0
        %587 = vmatpush1.bf16.msra.mxu0 0
        %588 = vmatprep.subr.bf16.mxu0 0
        %589 = vmatpush1.bf16.msra.mxu0 0
        %590 = vmatprep.subr.bf16.mxu0 0
        %591 = vmatpush1.bf16.msra.mxu0 0
        %592 = vmatprep.subr.bf16.mxu0 0
        %593 = vmatpush1.bf16.msra.mxu0 0
        %594 = vmatprep.subr.bf16.mxu0 0
        %595 = vmatpush1.bf16.msra.mxu0 0
        %596 = vmatprep.subr.bf16.mxu0 0
        %597 = vmatpush1.bf16.msra.mxu0 0
        %598 = vmatprep.subr.bf16.mxu0 0
        %599 = vmatpush1.bf16.msra.mxu0 0
        %600 = vmatprep.subr.bf16.mxu0 0
        %601 = vmatpush1.bf16.msra.mxu0 0
        %602 = vmatprep.subr.bf16.mxu0 0
        %603 = vmatpush1.bf16.msra.mxu0 0
        %604 = vmatprep.subr.bf16.mxu0 0
        %605 = vmatpush1.bf16.msra.mxu0 0
        %606 = vmatprep.subr.bf16.mxu0 0
        %607 = vmatpush1.bf16.msra.mxu0 0
        %608 = vmatprep.subr.bf16.mxu0 0
        %609 = vmatpush1.bf16.msra.mxu0 0
        %610 = vmatprep.subr.bf16.mxu0 0
        %611 = vmatpush1.bf16.msra.mxu0 0
        %612 = vmatprep.subr.bf16.mxu0 0
        %613 = vmatpush1.bf16.msra.mxu0 0
        %614 = vmatprep.mubr.bf16.mxu0 0
        %615 = vmatmul.mubr.bf16.gmra.mrb[0].mxu0 %v537
        %v616 = vpop.f32.mrb[0].mxu0
        %v617 = vadd.f32 %v523, %v616
        %v618 = vpop.f32.mrb[0].mxu0
        %v619 = vadd.f32 %v523, %v618
        %v620 = vpop.f32.mrb[0].mxu0
        %v621 = vadd.f32 %v528, %v620
        %v622 = vpop.f32.mrb[0].mxu0
        %v623 = vadd.f32 %v528, %v622
        %624 = vdwg.mxu0
        %625 = vmatprep.subr.bf16.mxu0 %v514
        %626 = vmatpush1.bf16.msra.mxu0 %v513
        %627 = vmatprep.subr.bf16.mxu0 0
        %628 = vmatpush1.bf16.msra.mxu0 0
        %629 = vmatprep.subr.bf16.mxu0 0
        %630 = vmatpush1.bf16.msra.mxu0 0
        %631 = vmatprep.subr.bf16.mxu0 0
        %632 = vmatpush1.bf16.msra.mxu0 0
        %633 = vmatprep.subr.bf16.mxu0 0
        %634 = vmatpush1.bf16.msra.mxu0 0
        %635 = vmatprep.subr.bf16.mxu0 0
        %636 = vmatpush1.bf16.msra.mxu0 0
        %637 = vmatprep.subr.bf16.mxu0 0
        %638 = vmatpush1.bf16.msra.mxu0 0
        %639 = vmatprep.subr.bf16.mxu0 0
        %640 = vmatpush1.bf16.msra.mxu0 0
        %641 = vmatprep.subr.bf16.mxu0 0
        %642 = vmatpush1.bf16.msra.mxu0 0
        %643 = vmatprep.subr.bf16.mxu0 0
        %644 = vmatpush1.bf16.msra.mxu0 0
        %645 = vmatprep.subr.bf16.mxu0 0
        %646 = vmatpush1.bf16.msra.mxu0 0
        %647 = vmatprep.subr.bf16.mxu0 0
        %648 = vmatpush1.bf16.msra.mxu0 0
        %649 = vmatprep.subr.bf16.mxu0 0
        %650 = vmatpush1.bf16.msra.mxu0 0
        %651 = vmatprep.subr.bf16.mxu0 0
        %652 = vmatpush1.bf16.msra.mxu0 0
        %653 = vmatprep.subr.bf16.mxu0 0
        %654 = vmatpush1.bf16.msra.mxu0 0
        %655 = vmatprep.subr.bf16.mxu0 0
        %656 = vmatpush1.bf16.msra.mxu0 0
        %657 = vmatprep.mubr.bf16.mxu0 0
        %658 = vmatmul.mubr.bf16.gmra.mrb[0].mxu0 %v537
        %v659 = vpop.f32.mrb[0].mxu0
        %v660 = vadd.f32 %v523, %v659
        %v661 = vpop.f32.mrb[0].mxu0
        %v662 = vadd.f32 %v523, %v661
        %v663 = vpop.f32.mrb[0].mxu0
        %v664 = vadd.f32 %v528, %v663
        %v665 = vpop.f32.mrb[0].mxu0
        %v666 = vadd.f32 %v528, %v665
        %667 = vdwg.mxu0
        %668 = vmatprep.subr.bf16.mxu0 %v516
        %669 = vmatpush1.bf16.msra.mxu0 %v515
        %670 = vmatprep.subr.bf16.mxu0 0
        %671 = vmatpush1.bf16.msra.mxu0 0
        %672 = vmatprep.subr.bf16.mxu0 0
        %673 = vmatpush1.bf16.msra.mxu0 0
        %674 = vmatprep.subr.bf16.mxu0 0
        %675 = vmatpush1.bf16.msra.mxu0 0
        %676 = vmatprep.subr.bf16.mxu0 0
        %677 = vmatpush1.bf16.msra.mxu0 0
        %678 = vmatprep.subr.bf16.mxu0 0
        %679 = vmatpush1.bf16.msra.mxu0 0
        %680 = vmatprep.subr.bf16.mxu0 0
        %681 = vmatpush1.bf16.msra.mxu0 0
        %682 = vmatprep.subr.bf16.mxu0 0
        %683 = vmatpush1.bf16.msra.mxu0 0
        %684 = vmatprep.subr.bf16.mxu0 0
        %685 = vmatpush1.bf16.msra.mxu0 0
        %686 = vmatprep.subr.bf16.mxu0 0
        %687 = vmatpush1.bf16.msra.mxu0 0
        %688 = vmatprep.subr.bf16.mxu0 0
        %689 = vmatpush1.bf16.msra.mxu0 0
        %690 = vmatprep.subr.bf16.mxu0 0
        %691 = vmatpush1.bf16.msra.mxu0 0
        %692 = vmatprep.subr.bf16.mxu0 0
        %693 = vmatpush1.bf16.msra.mxu0 0
        %694 = vmatprep.subr.bf16.mxu0 0
        %695 = vmatpush1.bf16.msra.mxu0 0
        %696 = vmatprep.subr.bf16.mxu0 0
        %697 = vmatpush1.bf16.msra.mxu0 0
        %698 = vmatprep.subr.bf16.mxu0 0
        %699 = vmatpush1.bf16.msra.mxu0 0
        %700 = vmatprep.mubr.bf16.mxu0 0
        %701 = vmatmul.mubr.bf16.gmra.mrb[0].mxu0 %v537
        %v702 = vpop.f32.mrb[0].mxu0
        %v703 = vadd.f32 %v523, %v702
        %v704 = vpop.f32.mrb[0].mxu0
        %v705 = vadd.f32 %v523, %v704
        %v706 = vpop.f32.mrb[0].mxu0
        %v707 = vadd.f32 %v528, %v706
        %v708 = vpop.f32.mrb[0].mxu0
        %v709 = vadd.f32 %v528, %v708
        %710 = vdwg.mxu0
        %v711 = vsub.f32 0.0, %v574
        %v712 = vsub.f32 0.0, %v576
        %v713 = vsub.f32 0.0, %v617
        %v714 = vsub.f32 0.0, %v619
        %v715 = vsub.f32 0.0, %v660
        %v716 = vsub.f32 0.0, %v662
        %v717 = vsub.f32 0.0, %v703
        %v718 = vsub.f32 0.0, %v705
        %v719 = vsub.f32 0.0, %v578
        %v720 = vsub.f32 0.0, %v580
        %v721 = vsub.f32 0.0, %v621
        %v722 = vsub.f32 0.0, %v623
        %v723 = vsub.f32 0.0, %v664
        %v724 = vsub.f32 0.0, %v666
        %v725 = vsub.f32 0.0, %v707
        %v726 = vsub.f32 0.0, %v709
        %v727 = vmul.f32 %v711, 1.442695
        %v728 = vpow.pop %v727
        %v729 = vmul.f32 %v712, 1.442695
        %v730 = vpow.pop %v729
        %v731 = vmul.f32 %v713, 1.442695
        %v732 = vpow.pop %v731
        %v733 = vmul.f32 %v714, 1.442695
        %v734 = vpow.pop %v733
        %v735 = vmul.f32 %v715, 1.442695
        %v736 = vpow.pop %v735
        %v737 = vmul.f32 %v716, 1.442695
        %v738 = vpow.pop %v737
        %v739 = vmul.f32 %v717, 1.442695
        %v740 = vpow.pop %v739
        %v741 = vmul.f32 %v718, 1.442695
        %v742 = vpow.pop %v741
        %v743 = vmul.f32 %v719, 1.442695
        %v744 = vpow.pop %v743
        %v745 = vmul.f32 %v720, 1.442695
        %v746 = vpow.pop %v745
        %v747 = vmul.f32 %v721, 1.442695
        %v748 = vpow.pop %v747
        %v749 = vmul.f32 %v722, 1.442695
        %v750 = vpow.pop %v749
        %v751 = vmul.f32 %v723, 1.442695
        %v752 = vpow.pop %v751
        %v753 = vmul.f32 %v724, 1.442695
        %v754 = vpow.pop %v753
        %v755 = vmul.f32 %v725, 1.442695
        %v756 = vpow.pop %v755
        %v757 = vmul.f32 %v726, 1.442695
        %v758 = vpow.pop %v757
        %v759 = vadd.f32 %v728, 1.0
        %v760 = vadd.f32 %v730, 1.0
        %v761 = vadd.f32 %v732, 1.0
        %v762 = vadd.f32 %v734, 1.0
        %v763 = vadd.f32 %v736, 1.0
        %v764 = vadd.f32 %v738, 1.0
        %v765 = vadd.f32 %v740, 1.0
        %v766 = vadd.f32 %v742, 1.0
        %v767 = vadd.f32 %v744, 1.0
        %v768 = vadd.f32 %v746, 1.0
        %v769 = vadd.f32 %v748, 1.0
        %v770 = vadd.f32 %v750, 1.0
        %v771 = vadd.f32 %v752, 1.0
        %v772 = vadd.f32 %v754, 1.0
        %v773 = vadd.f32 %v756, 1.0
        %v774 = vadd.f32 %v758, 1.0
        %v775 = vrcp.pop %v759
        %v776 = vrcp.pop %v760
        %v777 = vrcp.pop %v761
        %v778 = vrcp.pop %v762
        %v779 = vrcp.pop %v763
        %v780 = vrcp.pop %v764
        %v781 = vrcp.pop %v765
        %v782 = vrcp.pop %v766
        %v783 = vrcp.pop %v767
        %v784 = vrcp.pop %v768
        %v785 = vrcp.pop %v769
        %v786 = vrcp.pop %v770
        %v787 = vrcp.pop %v771
        %v788 = vrcp.pop %v772
        %v789 = vrcp.pop %v773
        %v790 = vrcp.pop %v774
        %s791 = scalar_lea.vmem %s1, 16
        %v792 = vld [vmem:[%s791] sm:$0xf]
        %v793 = vld [vmem:[%s791 + $0x4] sm:$0xf]
        %v794 = vpack.c.bf16 %v783, %v775
        %v795 = vpack.c.bf16 %v784, %v776
        %v796 = vpack.c.bf16 %v785, %v777
        %v797 = vpack.c.bf16 %v786, %v778
        %v798 = vpack.c.bf16 %v787, %v779
        %v799 = vpack.c.bf16 %v788, %v780
        %v800 = vpack.c.bf16 %v789, %v781
        %v801 = vpack.c.bf16 %v790, %v782
        %s802 = scalar_lea.vmem %s2, 32
        %v803 = vld [vmem:[%s802] sm:$0xff]
        %v804 = vld [vmem:[%s802 + $0x8] sm:$0xff]
        %806 = vset.pattern.permute.xlu0 0
        %807 = vperm.xlu0 %806, %v803
        %v808 = vpop.permute.xlu0 %807
        %811 = vset.pattern.permute.xlu0 0
        %812 = vperm.xlu0 %811, %v804
        %v813 = vpop.permute.xlu0 %812
        %v817 = vunpack.c.l.b16 %v792
        %v818 = vunpack.c.l.b16 %v793
        %v819 = vpack.c.b16 %v818, %v817
        %v821 = vsel %vm535, %v819, 0
        %823 = vmatprep.subr.bf16.mxu0 %v795
        %824 = vmatpush1.bf16.msra.mxu0 %v794
        %825 = vmatprep.subr.bf16.mxu0 0
        %826 = vmatpush1.bf16.msra.mxu0 0
        %827 = vmatprep.subr.bf16.mxu0 0
        %828 = vmatpush1.bf16.msra.mxu0 0
        %829 = vmatprep.subr.bf16.mxu0 0
        %830 = vmatpush1.bf16.msra.mxu0 0
        %831 = vmatprep.subr.bf16.mxu0 0
        %832 = vmatpush1.bf16.msra.mxu0 0
        %833 = vmatprep.subr.bf16.mxu0 0
        %834 = vmatpush1.bf16.msra.mxu0 0
        %835 = vmatprep.subr.bf16.mxu0 0
        %836 = vmatpush1.bf16.msra.mxu0 0
        %837 = vmatprep.subr.bf16.mxu0 0
        %838 = vmatpush1.bf16.msra.mxu0 0
        %839 = vmatprep.subr.bf16.mxu0 0
        %840 = vmatpush1.bf16.msra.mxu0 0
        %841 = vmatprep.subr.bf16.mxu0 0
        %842 = vmatpush1.bf16.msra.mxu0 0
        %843 = vmatprep.subr.bf16.mxu0 0
        %844 = vmatpush1.bf16.msra.mxu0 0
        %845 = vmatprep.subr.bf16.mxu0 0
        %846 = vmatpush1.bf16.msra.mxu0 0
        %847 = vmatprep.subr.bf16.mxu0 0
        %848 = vmatpush1.bf16.msra.mxu0 0
        %849 = vmatprep.subr.bf16.mxu0 0
        %850 = vmatpush1.bf16.msra.mxu0 0
        %851 = vmatprep.subr.bf16.mxu0 0
        %852 = vmatpush1.bf16.msra.mxu0 0
        %853 = vmatprep.subr.bf16.mxu0 0
        %854 = vmatpush1.bf16.msra.mxu0 0
        %855 = vmatprep.mubr.bf16.mxu0 0
        %856 = vmatmul.mubr.bf16.gmra.mrb[0].mxu0 %v821
        %v857 = vpop.f32.mrb[0].mxu0
        %v858 = vadd.f32 %v808, %v857
        %v859 = vpop.f32.mrb[0].mxu0
        %v860 = vadd.f32 %v808, %v859
        %v861 = vpop.f32.mrb[0].mxu0
        %v862 = vadd.f32 %v813, %v861
        %v863 = vpop.f32.mrb[0].mxu0
        %v864 = vadd.f32 %v813, %v863
        %865 = vdwg.mxu0
        %866 = vmatprep.subr.bf16.mxu0 %v797
        %867 = vmatpush1.bf16.msra.mxu0 %v796
        %868 = vmatprep.subr.bf16.mxu0 0
        %869 = vmatpush1.bf16.msra.mxu0 0
        %870 = vmatprep.subr.bf16.mxu0 0
        %871 = vmatpush1.bf16.msra.mxu0 0
        %872 = vmatprep.subr.bf16.mxu0 0
        %873 = vmatpush1.bf16.msra.mxu0 0
        %874 = vmatprep.subr.bf16.mxu0 0
        %875 = vmatpush1.bf16.msra.mxu0 0
        %876 = vmatprep.subr.bf16.mxu0 0
        %877 = vmatpush1.bf16.msra.mxu0 0
        %878 = vmatprep.subr.bf16.mxu0 0
        %879 = vmatpush1.bf16.msra.mxu0 0
        %880 = vmatprep.subr.bf16.mxu0 0
        %881 = vmatpush1.bf16.msra.mxu0 0
        %882 = vmatprep.subr.bf16.mxu0 0
        %883 = vmatpush1.bf16.msra.mxu0 0
        %884 = vmatprep.subr.bf16.mxu0 0
        %885 = vmatpush1.bf16.msra.mxu0 0
        %886 = vmatprep.subr.bf16.mxu0 0
        %887 = vmatpush1.bf16.msra.mxu0 0
        %888 = vmatprep.subr.bf16.mxu0 0
        %889 = vmatpush1.bf16.msra.mxu0 0
        %890 = vmatprep.subr.bf16.mxu0 0
        %891 = vmatpush1.bf16.msra.mxu0 0
        %892 = vmatprep.subr.bf16.mxu0 0
        %893 = vmatpush1.bf16.msra.mxu0 0
        %894 = vmatprep.subr.bf16.mxu0 0
        %895 = vmatpush1.bf16.msra.mxu0 0
        %896 = vmatprep.subr.bf16.mxu0 0
        %897 = vmatpush1.bf16.msra.mxu0 0
        %898 = vmatprep.mubr.bf16.mxu0 0
        %899 = vmatmul.mubr.bf16.gmra.mrb[0].mxu0 %v821
        %v900 = vpop.f32.mrb[0].mxu0
        %v901 = vadd.f32 %v808, %v900
        %v902 = vpop.f32.mrb[0].mxu0
        %v903 = vadd.f32 %v808, %v902
        %v904 = vpop.f32.mrb[0].mxu0
        %v905 = vadd.f32 %v813, %v904
        %v906 = vpop.f32.mrb[0].mxu0
        %v907 = vadd.f32 %v813, %v906
        %908 = vdwg.mxu0
        %909 = vmatprep.subr.bf16.mxu0 %v799
        %910 = vmatpush1.bf16.msra.mxu0 %v798
        %911 = vmatprep.subr.bf16.mxu0 0
        %912 = vmatpush1.bf16.msra.mxu0 0
        %913 = vmatprep.subr.bf16.mxu0 0
        %914 = vmatpush1.bf16.msra.mxu0 0
        %915 = vmatprep.subr.bf16.mxu0 0
        %916 = vmatpush1.bf16.msra.mxu0 0
        %917 = vmatprep.subr.bf16.mxu0 0
        %918 = vmatpush1.bf16.msra.mxu0 0
        %919 = vmatprep.subr.bf16.mxu0 0
        %920 = vmatpush1.bf16.msra.mxu0 0
        %921 = vmatprep.subr.bf16.mxu0 0
        %922 = vmatpush1.bf16.msra.mxu0 0
        %923 = vmatprep.subr.bf16.mxu0 0
        %924 = vmatpush1.bf16.msra.mxu0 0
        %925 = vmatprep.subr.bf16.mxu0 0
        %926 = vmatpush1.bf16.msra.mxu0 0
        %927 = vmatprep.subr.bf16.mxu0 0
        %928 = vmatpush1.bf16.msra.mxu0 0
        %929 = vmatprep.subr.bf16.mxu0 0
        %930 = vmatpush1.bf16.msra.mxu0 0
        %931 = vmatprep.subr.bf16.mxu0 0
        %932 = vmatpush1.bf16.msra.mxu0 0
        %933 = vmatprep.subr.bf16.mxu0 0
        %934 = vmatpush1.bf16.msra.mxu0 0
        %935 = vmatprep.subr.bf16.mxu0 0
        %936 = vmatpush1.bf16.msra.mxu0 0
        %937 = vmatprep.subr.bf16.mxu0 0
        %938 = vmatpush1.bf16.msra.mxu0 0
        %939 = vmatprep.subr.bf16.mxu0 0
        %940 = vmatpush1.bf16.msra.mxu0 0
        %941 = vmatprep.mubr.bf16.mxu0 0
        %942 = vmatmul.mubr.bf16.gmra.mrb[0].mxu0 %v821
        %v943 = vpop.f32.mrb[0].mxu0
        %v944 = vadd.f32 %v808, %v943
        %v945 = vpop.f32.mrb[0].mxu0
        %v946 = vadd.f32 %v808, %v945
        %v947 = vpop.f32.mrb[0].mxu0
        %v948 = vadd.f32 %v813, %v947
        %v949 = vpop.f32.mrb[0].mxu0
        %v950 = vadd.f32 %v813, %v949
        %951 = vdwg.mxu0
        %952 = vmatprep.subr.bf16.mxu0 %v801
        %953 = vmatpush1.bf16.msra.mxu0 %v800
        %954 = vmatprep.subr.bf16.mxu0 0
        %955 = vmatpush1.bf16.msra.mxu0 0
        %956 = vmatprep.subr.bf16.mxu0 0
        %957 = vmatpush1.bf16.msra.mxu0 0
        %958 = vmatprep.subr.bf16.mxu0 0
        %959 = vmatpush1.bf16.msra.mxu0 0
        %960 = vmatprep.subr.bf16.mxu0 0
        %961 = vmatpush1.bf16.msra.mxu0 0
        %962 = vmatprep.subr.bf16.mxu0 0
        %963 = vmatpush1.bf16.msra.mxu0 0
        %964 = vmatprep.subr.bf16.mxu0 0
        %965 = vmatpush1.bf16.msra.mxu0 0
        %966 = vmatprep.subr.bf16.mxu0 0
        %967 = vmatpush1.bf16.msra.mxu0 0
        %968 = vmatprep.subr.bf16.mxu0 0
        %969 = vmatpush1.bf16.msra.mxu0 0
        %970 = vmatprep.subr.bf16.mxu0 0
        %971 = vmatpush1.bf16.msra.mxu0 0
        %972 = vmatprep.subr.bf16.mxu0 0
        %973 = vmatpush1.bf16.msra.mxu0 0
        %974 = vmatprep.subr.bf16.mxu0 0
        %975 = vmatpush1.bf16.msra.mxu0 0
        %976 = vmatprep.subr.bf16.mxu0 0
        %977 = vmatpush1.bf16.msra.mxu0 0
        %978 = vmatprep.subr.bf16.mxu0 0
        %979 = vmatpush1.bf16.msra.mxu0 0
        %980 = vmatprep.subr.bf16.mxu0 0
        %981 = vmatpush1.bf16.msra.mxu0 0
        %982 = vmatprep.subr.bf16.mxu0 0
        %983 = vmatpush1.bf16.msra.mxu0 0
        %984 = vmatprep.mubr.bf16.mxu0 0
        %985 = vmatmul.mubr.bf16.gmra.mrb[0].mxu0 %v821
        %v986 = vpop.f32.mrb[0].mxu0
        %v987 = vadd.f32 %v808, %v986
        %v988 = vpop.f32.mrb[0].mxu0
        %v989 = vadd.f32 %v808, %v988
        %v990 = vpop.f32.mrb[0].mxu0
        %v991 = vadd.f32 %v813, %v990
        %v992 = vpop.f32.mrb[0].mxu0
        %v993 = vadd.f32 %v813, %v992
        %994 = vdwg.mxu0
        %v995 = vsub.f32 0.0, %v858
        %v996 = vsub.f32 0.0, %v860
        %v997 = vsub.f32 0.0, %v901
        %v998 = vsub.f32 0.0, %v903
        %v999 = vsub.f32 0.0, %v944
        %v1000 = vsub.f32 0.0, %v946
        %v1001 = vsub.f32 0.0, %v987
        %v1002 = vsub.f32 0.0, %v989
        %v1003 = vsub.f32 0.0, %v862
        %v1004 = vsub.f32 0.0, %v864
        %v1005 = vsub.f32 0.0, %v905
        %v1006 = vsub.f32 0.0, %v907
        %v1007 = vsub.f32 0.0, %v948
        %v1008 = vsub.f32 0.0, %v950
        %v1009 = vsub.f32 0.0, %v991
        %v1010 = vsub.f32 0.0, %v993
        %v1011 = vmul.f32 %v995, 1.442695
        %v1012 = vpow.pop %v1011
        %v1013 = vmul.f32 %v996, 1.442695
        %v1014 = vpow.pop %v1013
        %v1015 = vmul.f32 %v997, 1.442695
        %v1016 = vpow.pop %v1015
        %v1017 = vmul.f32 %v998, 1.442695
        %v1018 = vpow.pop %v1017
        %v1019 = vmul.f32 %v999, 1.442695
        %v1020 = vpow.pop %v1019
        %v1021 = vmul.f32 %v1000, 1.442695
        %v1022 = vpow.pop %v1021
        %v1023 = vmul.f32 %v1001, 1.442695
        %v1024 = vpow.pop %v1023
        %v1025 = vmul.f32 %v1002, 1.442695
        %v1026 = vpow.pop %v1025
        %v1027 = vmul.f32 %v1003, 1.442695
        %v1028 = vpow.pop %v1027
        %v1029 = vmul.f32 %v1004, 1.442695
        %v1030 = vpow.pop %v1029
        %v1031 = vmul.f32 %v1005, 1.442695
        %v1032 = vpow.pop %v1031
        %v1033 = vmul.f32 %v1006, 1.442695
        %v1034 = vpow.pop %v1033
        %v1035 = vmul.f32 %v1007, 1.442695
        %v1036 = vpow.pop %v1035
        %v1037 = vmul.f32 %v1008, 1.442695
        %v1038 = vpow.pop %v1037
        %v1039 = vmul.f32 %v1009, 1.442695
        %v1040 = vpow.pop %v1039
        %v1041 = vmul.f32 %v1010, 1.442695
        %v1042 = vpow.pop %v1041
        %v1043 = vadd.f32 %v1012, 1.0
        %v1044 = vadd.f32 %v1014, 1.0
        %v1045 = vadd.f32 %v1016, 1.0
        %v1046 = vadd.f32 %v1018, 1.0
        %v1047 = vadd.f32 %v1020, 1.0
        %v1048 = vadd.f32 %v1022, 1.0
        %v1049 = vadd.f32 %v1024, 1.0
        %v1050 = vadd.f32 %v1026, 1.0
        %v1051 = vadd.f32 %v1028, 1.0
        %v1052 = vadd.f32 %v1030, 1.0
        %v1053 = vadd.f32 %v1032, 1.0
        %v1054 = vadd.f32 %v1034, 1.0
        %v1055 = vadd.f32 %v1036, 1.0
        %v1056 = vadd.f32 %v1038, 1.0
        %v1057 = vadd.f32 %v1040, 1.0
        %v1058 = vadd.f32 %v1042, 1.0
        %v1059 = vrcp.pop %v1043
        %v1060 = vrcp.pop %v1044
        %v1061 = vrcp.pop %v1045
        %v1062 = vrcp.pop %v1046
        %v1063 = vrcp.pop %v1047
        %v1064 = vrcp.pop %v1048
        %v1065 = vrcp.pop %v1049
        %v1066 = vrcp.pop %v1050
        %v1067 = vrcp.pop %v1051
        %v1068 = vrcp.pop %v1052
        %v1069 = vrcp.pop %v1053
        %v1070 = vrcp.pop %v1054
        %v1071 = vrcp.pop %v1055
        %v1072 = vrcp.pop %v1056
        %v1073 = vrcp.pop %v1057
        %v1074 = vrcp.pop %v1058
        %s1075 = scalar_lea.vmem %s1, 24
        %v1076 = vld [vmem:[%s1075] sm:$0xf]
        %v1077 = vld [vmem:[%s1075 + $0x4] sm:$0xf]
        %v1078 = vpack.c.bf16 %v1067, %v1059
        %v1079 = vpack.c.bf16 %v1068, %v1060
        %v1080 = vpack.c.bf16 %v1069, %v1061
        %v1081 = vpack.c.bf16 %v1070, %v1062
        %v1082 = vpack.c.bf16 %v1071, %v1063
        %v1083 = vpack.c.bf16 %v1072, %v1064
        %v1084 = vpack.c.bf16 %v1073, %v1065
        %v1085 = vpack.c.bf16 %v1074, %v1066
        %s1086 = scalar_lea.vmem %s2, 48
        %v1087 = vld [vmem:[%s1086] sm:$0xff]
        %v1088 = vld [vmem:[%s1086 + $0x8] sm:$0xff]
        %1090 = vset.pattern.permute.xlu0 0
        %1091 = vperm.xlu0 %1090, %v1087
        %v1092 = vpop.permute.xlu0 %1091
        %1095 = vset.pattern.permute.xlu0 0
        %1096 = vperm.xlu0 %1095, %v1088
        %v1097 = vpop.permute.xlu0 %1096
        %v1101 = vunpack.c.l.b16 %v1076
        %v1102 = vunpack.c.l.b16 %v1077
        %v1103 = vpack.c.b16 %v1102, %v1101
        %v1105 = vsel %vm535, %v1103, 0
        %1107 = vmatprep.subr.bf16.mxu0 %v1079
        %1108 = vmatpush1.bf16.msra.mxu0 %v1078
        %1109 = vmatprep.subr.bf16.mxu0 0
        %1110 = vmatpush1.bf16.msra.mxu0 0
        %1111 = vmatprep.subr.bf16.mxu0 0
        %1112 = vmatpush1.bf16.msra.mxu0 0
        %1113 = vmatprep.subr.bf16.mxu0 0
        %1114 = vmatpush1.bf16.msra.mxu0 0
        %1115 = vmatprep.subr.bf16.mxu0 0
        %1116 = vmatpush1.bf16.msra.mxu0 0
        %1117 = vmatprep.subr.bf16.mxu0 0
        %1118 = vmatpush1.bf16.msra.mxu0 0
        %1119 = vmatprep.subr.bf16.mxu0 0
        %1120 = vmatpush1.bf16.msra.mxu0 0
        %1121 = vmatprep.subr.bf16.mxu0 0
        %1122 = vmatpush1.bf16.msra.mxu0 0
        %1123 = vmatprep.subr.bf16.mxu0 0
        %1124 = vmatpush1.bf16.msra.mxu0 0
        %1125 = vmatprep.subr.bf16.mxu0 0
        %1126 = vmatpush1.bf16.msra.mxu0 0
        %1127 = vmatprep.subr.bf16.mxu0 0
        %1128 = vmatpush1.bf16.msra.mxu0 0
        %1129 = vmatprep.subr.bf16.mxu0 0
        %1130 = vmatpush1.bf16.msra.mxu0 0
        %1131 = vmatprep.subr.bf16.mxu0 0
        %1132 = vmatpush1.bf16.msra.mxu0 0
        %1133 = vmatprep.subr.bf16.mxu0 0
        %1134 = vmatpush1.bf16.msra.mxu0 0
        %1135 = vmatprep.subr.bf16.mxu0 0
        %1136 = vmatpush1.bf16.msra.mxu0 0
        %1137 = vmatprep.subr.bf16.mxu0 0
        %1138 = vmatpush1.bf16.msra.mxu0 0
        %1139 = vmatprep.mubr.bf16.mxu0 0
        %1140 = vmatmul.mubr.bf16.gmra.mrb[0].mxu0 %v1105
        %v1141 = vpop.f32.mrb[0].mxu0
        %v1142 = vadd.f32 %v1092, %v1141
        %v1143 = vpop.f32.mrb[0].mxu0
        %v1144 = vadd.f32 %v1092, %v1143
        %v1145 = vpop.f32.mrb[0].mxu0
        %v1146 = vadd.f32 %v1097, %v1145
        %v1147 = vpop.f32.mrb[0].mxu0
        %v1148 = vadd.f32 %v1097, %v1147
        %1149 = vdwg.mxu0
        %1150 = vmatprep.subr.bf16.mxu0 %v1081
        %1151 = vmatpush1.bf16.msra.mxu0 %v1080
        %1152 = vmatprep.subr.bf16.mxu0 0
        %1153 = vmatpush1.bf16.msra.mxu0 0
        %1154 = vmatprep.subr.bf16.mxu0 0
        %1155 = vmatpush1.bf16.msra.mxu0 0
        %1156 = vmatprep.subr.bf16.mxu0 0
        %1157 = vmatpush1.bf16.msra.mxu0 0
        %1158 = vmatprep.subr.bf16.mxu0 0
        %1159 = vmatpush1.bf16.msra.mxu0 0
        %1160 = vmatprep.subr.bf16.mxu0 0
        %1161 = vmatpush1.bf16.msra.mxu0 0
        %1162 = vmatprep.subr.bf16.mxu0 0
        %1163 = vmatpush1.bf16.msra.mxu0 0
        %1164 = vmatprep.subr.bf16.mxu0 0
        %1165 = vmatpush1.bf16.msra.mxu0 0
        %1166 = vmatprep.subr.bf16.mxu0 0
        %1167 = vmatpush1.bf16.msra.mxu0 0
        %1168 = vmatprep.subr.bf16.mxu0 0
        %1169 = vmatpush1.bf16.msra.mxu0 0
        %1170 = vmatprep.subr.bf16.mxu0 0
        %1171 = vmatpush1.bf16.msra.mxu0 0
        %1172 = vmatprep.subr.bf16.mxu0 0
        %1173 = vmatpush1.bf16.msra.mxu0 0
        %1174 = vmatprep.subr.bf16.mxu0 0
        %1175 = vmatpush1.bf16.msra.mxu0 0
        %1176 = vmatprep.subr.bf16.mxu0 0
        %1177 = vmatpush1.bf16.msra.mxu0 0
        %1178 = vmatprep.subr.bf16.mxu0 0
        %1179 = vmatpush1.bf16.msra.mxu0 0
        %1180 = vmatprep.subr.bf16.mxu0 0
        %1181 = vmatpush1.bf16.msra.mxu0 0
        %1182 = vmatprep.mubr.bf16.mxu0 0
        %1183 = vmatmul.mubr.bf16.gmra.mrb[0].mxu0 %v1105
        %v1184 = vpop.f32.mrb[0].mxu0
        %v1185 = vadd.f32 %v1092, %v1184
        %v1186 = vpop.f32.mrb[0].mxu0
        %v1187 = vadd.f32 %v1092, %v1186
        %v1188 = vpop.f32.mrb[0].mxu0
        %v1189 = vadd.f32 %v1097, %v1188
        %v1190 = vpop.f32.mrb[0].mxu0
        %v1191 = vadd.f32 %v1097, %v1190
        %1192 = vdwg.mxu0
        %1193 = vmatprep.subr.bf16.mxu0 %v1083
        %1194 = vmatpush1.bf16.msra.mxu0 %v1082
        %1195 = vmatprep.subr.bf16.mxu0 0
        %1196 = vmatpush1.bf16.msra.mxu0 0
        %1197 = vmatprep.subr.bf16.mxu0 0
        %1198 = vmatpush1.bf16.msra.mxu0 0
        %1199 = vmatprep.subr.bf16.mxu0 0
        %1200 = vmatpush1.bf16.msra.mxu0 0
        %1201 = vmatprep.subr.bf16.mxu0 0
        %1202 = vmatpush1.bf16.msra.mxu0 0
        %1203 = vmatprep.subr.bf16.mxu0 0
        %1204 = vmatpush1.bf16.msra.mxu0 0
        %1205 = vmatprep.subr.bf16.mxu0 0
        %1206 = vmatpush1.bf16.msra.mxu0 0
        %1207 = vmatprep.subr.bf16.mxu0 0
        %1208 = vmatpush1.bf16.msra.mxu0 0
        %1209 = vmatprep.subr.bf16.mxu0 0
        %1210 = vmatpush1.bf16.msra.mxu0 0
        %1211 = vmatprep.subr.bf16.mxu0 0
        %1212 = vmatpush1.bf16.msra.mxu0 0
        %1213 = vmatprep.subr.bf16.mxu0 0
        %1214 = vmatpush1.bf16.msra.mxu0 0
        %1215 = vmatprep.subr.bf16.mxu0 0
        %1216 = vmatpush1.bf16.msra.mxu0 0
        %1217 = vmatprep.subr.bf16.mxu0 0
        %1218 = vmatpush1.bf16.msra.mxu0 0
        %1219 = vmatprep.subr.bf16.mxu0 0
        %1220 = vmatpush1.bf16.msra.mxu0 0
        %1221 = vmatprep.subr.bf16.mxu0 0
        %1222 = vmatpush1.bf16.msra.mxu0 0
        %1223 = vmatprep.subr.bf16.mxu0 0
        %1224 = vmatpush1.bf16.msra.mxu0 0
        %1225 = vmatprep.mubr.bf16.mxu0 0
        %1226 = vmatmul.mubr.bf16.gmra.mrb[0].mxu0 %v1105
        %v1227 = vpop.f32.mrb[0].mxu0
        %v1228 = vadd.f32 %v1092, %v1227
        %v1229 = vpop.f32.mrb[0].mxu0
        %v1230 = vadd.f32 %v1092, %v1229
        %v1231 = vpop.f32.mrb[0].mxu0
        %v1232 = vadd.f32 %v1097, %v1231
        %v1233 = vpop.f32.mrb[0].mxu0
        %v1234 = vadd.f32 %v1097, %v1233
        %1235 = vdwg.mxu0
        %1236 = vmatprep.subr.bf16.mxu0 %v1085
        %1237 = vmatpush1.bf16.msra.mxu0 %v1084
        %1238 = vmatprep.subr.bf16.mxu0 0
        %1239 = vmatpush1.bf16.msra.mxu0 0
        %1240 = vmatprep.subr.bf16.mxu0 0
        %1241 = vmatpush1.bf16.msra.mxu0 0
        %1242 = vmatprep.subr.bf16.mxu0 0
        %1243 = vmatpush1.bf16.msra.mxu0 0
        %1244 = vmatprep.subr.bf16.mxu0 0
        %1245 = vmatpush1.bf16.msra.mxu0 0
        %1246 = vmatprep.subr.bf16.mxu0 0
        %1247 = vmatpush1.bf16.msra.mxu0 0
        %1248 = vmatprep.subr.bf16.mxu0 0
        %1249 = vmatpush1.bf16.msra.mxu0 0
        %1250 = vmatprep.subr.bf16.mxu0 0
        %1251 = vmatpush1.bf16.msra.mxu0 0
        %1252 = vmatprep.subr.bf16.mxu0 0
        %1253 = vmatpush1.bf16.msra.mxu0 0
        %1254 = vmatprep.subr.bf16.mxu0 0
        %1255 = vmatpush1.bf16.msra.mxu0 0
        %1256 = vmatprep.subr.bf16.mxu0 0
        %1257 = vmatpush1.bf16.msra.mxu0 0
        %1258 = vmatprep.subr.bf16.mxu0 0
        %1259 = vmatpush1.bf16.msra.mxu0 0
        %1260 = vmatprep.subr.bf16.mxu0 0
        %1261 = vmatpush1.bf16.msra.mxu0 0
        %1262 = vmatprep.subr.bf16.mxu0 0
        %1263 = vmatpush1.bf16.msra.mxu0 0
        %1264 = vmatprep.subr.bf16.mxu0 0
        %1265 = vmatpush1.bf16.msra.mxu0 0
        %1266 = vmatprep.subr.bf16.mxu0 0
        %1267 = vmatpush1.bf16.msra.mxu0 0
        %1268 = vmatprep.mubr.bf16.mxu0 0
        %1269 = vmatmul.mubr.bf16.gmra.mrb[0].mxu0 %v1105
        %v1270 = vpop.f32.mrb[0].mxu0
        %v1271 = vadd.f32 %v1092, %v1270
        %v1272 = vpop.f32.mrb[0].mxu0
        %v1273 = vadd.f32 %v1092, %v1272
        %v1274 = vpop.f32.mrb[0].mxu0
        %v1275 = vadd.f32 %v1097, %v1274
        %v1276 = vpop.f32.mrb[0].mxu0
        %v1277 = vadd.f32 %v1097, %v1276
        %1278 = vdwg.mxu0
        %v1279 = vsub.f32 0.0, %v1142
        %v1280 = vsub.f32 0.0, %v1144
        %v1281 = vsub.f32 0.0, %v1185
        %v1282 = vsub.f32 0.0, %v1187
        %v1283 = vsub.f32 0.0, %v1228
        %v1284 = vsub.f32 0.0, %v1230
        %v1285 = vsub.f32 0.0, %v1271
        %v1286 = vsub.f32 0.0, %v1273
        %v1287 = vsub.f32 0.0, %v1146
        %v1288 = vsub.f32 0.0, %v1148
        %v1289 = vsub.f32 0.0, %v1189
        %v1290 = vsub.f32 0.0, %v1191
        %v1291 = vsub.f32 0.0, %v1232
        %v1292 = vsub.f32 0.0, %v1234
        %v1293 = vsub.f32 0.0, %v1275
        %v1294 = vsub.f32 0.0, %v1277
        %v1295 = vmul.f32 %v1279, 1.442695
        %v1296 = vpow.pop %v1295
        %v1297 = vmul.f32 %v1280, 1.442695
        %v1298 = vpow.pop %v1297
        %v1299 = vmul.f32 %v1281, 1.442695
        %v1300 = vpow.pop %v1299
        %v1301 = vmul.f32 %v1282, 1.442695
        %v1302 = vpow.pop %v1301
        %v1303 = vmul.f32 %v1283, 1.442695
        %v1304 = vpow.pop %v1303
        %v1305 = vmul.f32 %v1284, 1.442695
        %v1306 = vpow.pop %v1305
        %v1307 = vmul.f32 %v1285, 1.442695
        %v1308 = vpow.pop %v1307
        %v1309 = vmul.f32 %v1286, 1.442695
        %v1310 = vpow.pop %v1309
        %v1311 = vmul.f32 %v1287, 1.442695
        %v1312 = vpow.pop %v1311
        %v1313 = vmul.f32 %v1288, 1.442695
        %v1314 = vpow.pop %v1313
        %v1315 = vmul.f32 %v1289, 1.442695
        %v1316 = vpow.pop %v1315
        %v1317 = vmul.f32 %v1290, 1.442695
        %v1318 = vpow.pop %v1317
        %v1319 = vmul.f32 %v1291, 1.442695
        %v1320 = vpow.pop %v1319
        %v1321 = vmul.f32 %v1292, 1.442695
        %v1322 = vpow.pop %v1321
        %v1323 = vmul.f32 %v1293, 1.442695
        %v1324 = vpow.pop %v1323
        %v1325 = vmul.f32 %v1294, 1.442695
        %v1326 = vpow.pop %v1325
        %v1327 = vadd.f32 %v1296, 1.0
        %v1328 = vadd.f32 %v1298, 1.0
        %v1329 = vadd.f32 %v1300, 1.0
        %v1330 = vadd.f32 %v1302, 1.0
        %v1331 = vadd.f32 %v1304, 1.0
        %v1332 = vadd.f32 %v1306, 1.0
        %v1333 = vadd.f32 %v1308, 1.0
        %v1334 = vadd.f32 %v1310, 1.0
        %v1335 = vadd.f32 %v1312, 1.0
        %v1336 = vadd.f32 %v1314, 1.0
        %v1337 = vadd.f32 %v1316, 1.0
        %v1338 = vadd.f32 %v1318, 1.0
        %v1339 = vadd.f32 %v1320, 1.0
        %v1340 = vadd.f32 %v1322, 1.0
        %v1341 = vadd.f32 %v1324, 1.0
        %v1342 = vadd.f32 %v1326, 1.0
        %v1343 = vrcp.pop %v1327
        %v1344 = vrcp.pop %v1328
        %v1345 = vrcp.pop %v1329
        %v1346 = vrcp.pop %v1330
        %v1347 = vrcp.pop %v1331
        %v1348 = vrcp.pop %v1332
        %v1349 = vrcp.pop %v1333
        %v1350 = vrcp.pop %v1334
        %v1351 = vrcp.pop %v1335
        %v1352 = vrcp.pop %v1336
        %v1353 = vrcp.pop %v1337
        %v1354 = vrcp.pop %v1338
        %v1355 = vrcp.pop %v1339
        %v1356 = vrcp.pop %v1340
        %v1357 = vrcp.pop %v1341
        %v1358 = vrcp.pop %v1342
        %s1359 = scalar_lea.vmem %s1, 32
        %v1360 = vld [vmem:[%s1359] sm:$0xf]
        %v1361 = vld [vmem:[%s1359 + $0x4] sm:$0xf]
        %v1362 = vpack.c.bf16 %v1351, %v1343
        %v1363 = vpack.c.bf16 %v1352, %v1344
        %v1364 = vpack.c.bf16 %v1353, %v1345
        %v1365 = vpack.c.bf16 %v1354, %v1346
        %v1366 = vpack.c.bf16 %v1355, %v1347
        %v1367 = vpack.c.bf16 %v1356, %v1348
        %v1368 = vpack.c.bf16 %v1357, %v1349
        %v1369 = vpack.c.bf16 %v1358, %v1350
        %s1370 = scalar_lea.vmem %s2, 64
        %v1371 = vld [vmem:[%s1370] sm:$0xff]
        %v1372 = vld [vmem:[%s1370 + $0x8] sm:$0xff]
        %1374 = vset.pattern.permute.xlu0 0
        %1375 = vperm.xlu0 %1374, %v1371
        %v1376 = vpop.permute.xlu0 %1375
        %1379 = vset.pattern.permute.xlu0 0
        %1380 = vperm.xlu0 %1379, %v1372
        %v1381 = vpop.permute.xlu0 %1380
        %v1385 = vunpack.c.l.b16 %v1360
        %v1386 = vunpack.c.l.b16 %v1361
        %v1387 = vpack.c.b16 %v1386, %v1385
        %v1389 = vsel %vm535, %v1387, 0
        %1391 = vmatprep.subr.bf16.mxu0 %v1363
        %1392 = vmatpush1.bf16.msra.mxu0 %v1362
        %1393 = vmatprep.subr.bf16.mxu0 0
        %1394 = vmatpush1.bf16.msra.mxu0 0
        %1395 = vmatprep.subr.bf16.mxu0 0
        %1396 = vmatpush1.bf16.msra.mxu0 0
        %1397 = vmatprep.subr.bf16.mxu0 0
        %1398 = vmatpush1.bf16.msra.mxu0 0
        %1399 = vmatprep.subr.bf16.mxu0 0
        %1400 = vmatpush1.bf16.msra.mxu0 0
        %1401 = vmatprep.subr.bf16.mxu0 0
        %1402 = vmatpush1.bf16.msra.mxu0 0
        %1403 = vmatprep.subr.bf16.mxu0 0
        %1404 = vmatpush1.bf16.msra.mxu0 0
        %1405 = vmatprep.subr.bf16.mxu0 0
        %1406 = vmatpush1.bf16.msra.mxu0 0
        %1407 = vmatprep.subr.bf16.mxu0 0
        %1408 = vmatpush1.bf16.msra.mxu0 0
        %1409 = vmatprep.subr.bf16.mxu0 0
        %1410 = vmatpush1.bf16.msra.mxu0 0
        %1411 = vmatprep.subr.bf16.mxu0 0
        %1412 = vmatpush1.bf16.msra.mxu0 0
        %1413 = vmatprep.subr.bf16.mxu0 0
        %1414 = vmatpush1.bf16.msra.mxu0 0
        %1415 = vmatprep.subr.bf16.mxu0 0
        %1416 = vmatpush1.bf16.msra.mxu0 0
        %1417 = vmatprep.subr.bf16.mxu0 0
        %1418 = vmatpush1.bf16.msra.mxu0 0
        %1419 = vmatprep.subr.bf16.mxu0 0
        %1420 = vmatpush1.bf16.msra.mxu0 0
        %1421 = vmatprep.subr.bf16.mxu0 0
        %1422 = vmatpush1.bf16.msra.mxu0 0
        %1423 = vmatprep.mubr.bf16.mxu0 0
        %1424 = vmatmul.mubr.bf16.gmra.mrb[0].mxu0 %v1389
        %v1425 = vpop.f32.mrb[0].mxu0
        %v1426 = vadd.f32 %v1376, %v1425
        %v1427 = vpop.f32.mrb[0].mxu0
        %v1428 = vadd.f32 %v1376, %v1427
        %v1429 = vpop.f32.mrb[0].mxu0
        %v1430 = vadd.f32 %v1381, %v1429
        %v1431 = vpop.f32.mrb[0].mxu0
        %v1432 = vadd.f32 %v1381, %v1431
        %1433 = vdwg.mxu0
        %1434 = vmatprep.subr.bf16.mxu0 %v1365
        %1435 = vmatpush1.bf16.msra.mxu0 %v1364
        %1436 = vmatprep.subr.bf16.mxu0 0
        %1437 = vmatpush1.bf16.msra.mxu0 0
        %1438 = vmatprep.subr.bf16.mxu0 0
        %1439 = vmatpush1.bf16.msra.mxu0 0
        %1440 = vmatprep.subr.bf16.mxu0 0
        %1441 = vmatpush1.bf16.msra.mxu0 0
        %1442 = vmatprep.subr.bf16.mxu0 0
        %1443 = vmatpush1.bf16.msra.mxu0 0
        %1444 = vmatprep.subr.bf16.mxu0 0
        %1445 = vmatpush1.bf16.msra.mxu0 0
        %1446 = vmatprep.subr.bf16.mxu0 0
        %1447 = vmatpush1.bf16.msra.mxu0 0
        %1448 = vmatprep.subr.bf16.mxu0 0
        %1449 = vmatpush1.bf16.msra.mxu0 0
        %1450 = vmatprep.subr.bf16.mxu0 0
        %1451 = vmatpush1.bf16.msra.mxu0 0
        %1452 = vmatprep.subr.bf16.mxu0 0
        %1453 = vmatpush1.bf16.msra.mxu0 0
        %1454 = vmatprep.subr.bf16.mxu0 0
        %1455 = vmatpush1.bf16.msra.mxu0 0
        %1456 = vmatprep.subr.bf16.mxu0 0
        %1457 = vmatpush1.bf16.msra.mxu0 0
        %1458 = vmatprep.subr.bf16.mxu0 0
        %1459 = vmatpush1.bf16.msra.mxu0 0
        %1460 = vmatprep.subr.bf16.mxu0 0
        %1461 = vmatpush1.bf16.msra.mxu0 0
        %1462 = vmatprep.subr.bf16.mxu0 0
        %1463 = vmatpush1.bf16.msra.mxu0 0
        %1464 = vmatprep.subr.bf16.mxu0 0
        %1465 = vmatpush1.bf16.msra.mxu0 0
        %1466 = vmatprep.mubr.bf16.mxu0 0
        %1467 = vmatmul.mubr.bf16.gmra.mrb[0].mxu0 %v1389
        %v1468 = vpop.f32.mrb[0].mxu0
        %v1469 = vadd.f32 %v1376, %v1468
        %v1470 = vpop.f32.mrb[0].mxu0
        %v1471 = vadd.f32 %v1376, %v1470
        %v1472 = vpop.f32.mrb[0].mxu0
        %v1473 = vadd.f32 %v1381, %v1472
        %v1474 = vpop.f32.mrb[0].mxu0
        %v1475 = vadd.f32 %v1381, %v1474
        %1476 = vdwg.mxu0
        %1477 = vmatprep.subr.bf16.mxu0 %v1367
        %1478 = vmatpush1.bf16.msra.mxu0 %v1366
        %1479 = vmatprep.subr.bf16.mxu0 0
        %1480 = vmatpush1.bf16.msra.mxu0 0
        %1481 = vmatprep.subr.bf16.mxu0 0
        %1482 = vmatpush1.bf16.msra.mxu0 0
        %1483 = vmatprep.subr.bf16.mxu0 0
        %1484 = vmatpush1.bf16.msra.mxu0 0
        %1485 = vmatprep.subr.bf16.mxu0 0
        %1486 = vmatpush1.bf16.msra.mxu0 0
        %1487 = vmatprep.subr.bf16.mxu0 0
        %1488 = vmatpush1.bf16.msra.mxu0 0
        %1489 = vmatprep.subr.bf16.mxu0 0
        %1490 = vmatpush1.bf16.msra.mxu0 0
        %1491 = vmatprep.subr.bf16.mxu0 0
        %1492 = vmatpush1.bf16.msra.mxu0 0
        %1493 = vmatprep.subr.bf16.mxu0 0
        %1494 = vmatpush1.bf16.msra.mxu0 0
        %1495 = vmatprep.subr.bf16.mxu0 0
        %1496 = vmatpush1.bf16.msra.mxu0 0
        %1497 = vmatprep.subr.bf16.mxu0 0
        %1498 = vmatpush1.bf16.msra.mxu0 0
        %1499 = vmatprep.subr.bf16.mxu0 0
        %1500 = vmatpush1.bf16.msra.mxu0 0
        %1501 = vmatprep.subr.bf16.mxu0 0
        %1502 = vmatpush1.bf16.msra.mxu0 0
        %1503 = vmatprep.subr.bf16.mxu0 0
        %1504 = vmatpush1.bf16.msra.mxu0 0
        %1505 = vmatprep.subr.bf16.mxu0 0
        %1506 = vmatpush1.bf16.msra.mxu0 0
        %1507 = vmatprep.subr.bf16.mxu0 0
        %1508 = vmatpush1.bf16.msra.mxu0 0
        %1509 = vmatprep.mubr.bf16.mxu0 0
        %1510 = vmatmul.mubr.bf16.gmra.mrb[0].mxu0 %v1389
        %v1511 = vpop.f32.mrb[0].mxu0
        %v1512 = vadd.f32 %v1376, %v1511
        %v1513 = vpop.f32.mrb[0].mxu0
        %v1514 = vadd.f32 %v1376, %v1513
        %v1515 = vpop.f32.mrb[0].mxu0
        %v1516 = vadd.f32 %v1381, %v1515
        %v1517 = vpop.f32.mrb[0].mxu0
        %v1518 = vadd.f32 %v1381, %v1517
        %1519 = vdwg.mxu0
        %1520 = vmatprep.subr.bf16.mxu0 %v1369
        %1521 = vmatpush1.bf16.msra.mxu0 %v1368
        %1522 = vmatprep.subr.bf16.mxu0 0
        %1523 = vmatpush1.bf16.msra.mxu0 0
        %1524 = vmatprep.subr.bf16.mxu0 0
        %1525 = vmatpush1.bf16.msra.mxu0 0
        %1526 = vmatprep.subr.bf16.mxu0 0
        %1527 = vmatpush1.bf16.msra.mxu0 0
        %1528 = vmatprep.subr.bf16.mxu0 0
        %1529 = vmatpush1.bf16.msra.mxu0 0
        %1530 = vmatprep.subr.bf16.mxu0 0
        %1531 = vmatpush1.bf16.msra.mxu0 0
        %1532 = vmatprep.subr.bf16.mxu0 0
        %1533 = vmatpush1.bf16.msra.mxu0 0
        %1534 = vmatprep.subr.bf16.mxu0 0
        %1535 = vmatpush1.bf16.msra.mxu0 0
        %1536 = vmatprep.subr.bf16.mxu0 0
        %1537 = vmatpush1.bf16.msra.mxu0 0
        %1538 = vmatprep.subr.bf16.mxu0 0
        %1539 = vmatpush1.bf16.msra.mxu0 0
        %1540 = vmatprep.subr.bf16.mxu0 0
        %1541 = vmatpush1.bf16.msra.mxu0 0
        %1542 = vmatprep.subr.bf16.mxu0 0
        %1543 = vmatpush1.bf16.msra.mxu0 0
        %1544 = vmatprep.subr.bf16.mxu0 0
        %1545 = vmatpush1.bf16.msra.mxu0 0
        %1546 = vmatprep.subr.bf16.mxu0 0
        %1547 = vmatpush1.bf16.msra.mxu0 0
        %1548 = vmatprep.subr.bf16.mxu0 0
        %1549 = vmatpush1.bf16.msra.mxu0 0
        %1550 = vmatprep.subr.bf16.mxu0 0
        %1551 = vmatpush1.bf16.msra.mxu0 0
        %1552 = vmatprep.mubr.bf16.mxu0 0
        %1553 = vmatmul.mubr.bf16.gmra.mrb[0].mxu0 %v1389
        %v1554 = vpop.f32.mrb[0].mxu0
        %v1555 = vadd.f32 %v1376, %v1554
        %v1556 = vpop.f32.mrb[0].mxu0
        %v1557 = vadd.f32 %v1376, %v1556
        %v1558 = vpop.f32.mrb[0].mxu0
        %v1559 = vadd.f32 %v1381, %v1558
        %v1560 = vpop.f32.mrb[0].mxu0
        %v1561 = vadd.f32 %v1381, %v1560
        %1562 = vdwg.mxu0
        %v1563 = vsub.f32 0.0, %v1426
        %v1564 = vsub.f32 0.0, %v1428
        %v1565 = vsub.f32 0.0, %v1469
        %v1566 = vsub.f32 0.0, %v1471
        %v1567 = vsub.f32 0.0, %v1512
        %v1568 = vsub.f32 0.0, %v1514
        %v1569 = vsub.f32 0.0, %v1555
        %v1570 = vsub.f32 0.0, %v1557
        %v1571 = vsub.f32 0.0, %v1430
        %v1572 = vsub.f32 0.0, %v1432
        %v1573 = vsub.f32 0.0, %v1473
        %v1574 = vsub.f32 0.0, %v1475
        %v1575 = vsub.f32 0.0, %v1516
        %v1576 = vsub.f32 0.0, %v1518
        %v1577 = vsub.f32 0.0, %v1559
        %v1578 = vsub.f32 0.0, %v1561
        %v1579 = vmul.f32 %v1563, 1.442695
        %v1580 = vpow.pop %v1579
        %v1581 = vmul.f32 %v1564, 1.442695
        %v1582 = vpow.pop %v1581
        %v1583 = vmul.f32 %v1565, 1.442695
        %v1584 = vpow.pop %v1583
        %v1585 = vmul.f32 %v1566, 1.442695
        %v1586 = vpow.pop %v1585
        %v1587 = vmul.f32 %v1567, 1.442695
        %v1588 = vpow.pop %v1587
        %v1589 = vmul.f32 %v1568, 1.442695
        %v1590 = vpow.pop %v1589
        %v1591 = vmul.f32 %v1569, 1.442695
        %v1592 = vpow.pop %v1591
        %v1593 = vmul.f32 %v1570, 1.442695
        %v1594 = vpow.pop %v1593
        %v1595 = vmul.f32 %v1571, 1.442695
        %v1596 = vpow.pop %v1595
        %v1597 = vmul.f32 %v1572, 1.442695
        %v1598 = vpow.pop %v1597
        %v1599 = vmul.f32 %v1573, 1.442695
        %v1600 = vpow.pop %v1599
        %v1601 = vmul.f32 %v1574, 1.442695
        %v1602 = vpow.pop %v1601
        %v1603 = vmul.f32 %v1575, 1.442695
        %v1604 = vpow.pop %v1603
        %v1605 = vmul.f32 %v1576, 1.442695
        %v1606 = vpow.pop %v1605
        %v1607 = vmul.f32 %v1577, 1.442695
        %v1608 = vpow.pop %v1607
        %v1609 = vmul.f32 %v1578, 1.442695
        %v1610 = vpow.pop %v1609
        %v1611 = vadd.f32 %v1580, 1.0
        %v1612 = vadd.f32 %v1582, 1.0
        %v1613 = vadd.f32 %v1584, 1.0
        %v1614 = vadd.f32 %v1586, 1.0
        %v1615 = vadd.f32 %v1588, 1.0
        %v1616 = vadd.f32 %v1590, 1.0
        %v1617 = vadd.f32 %v1592, 1.0
        %v1618 = vadd.f32 %v1594, 1.0
        %v1619 = vadd.f32 %v1596, 1.0
        %v1620 = vadd.f32 %v1598, 1.0
        %v1621 = vadd.f32 %v1600, 1.0
        %v1622 = vadd.f32 %v1602, 1.0
        %v1623 = vadd.f32 %v1604, 1.0
        %v1624 = vadd.f32 %v1606, 1.0
        %v1625 = vadd.f32 %v1608, 1.0
        %v1626 = vadd.f32 %v1610, 1.0
        %v1627 = vrcp.pop %v1611
        %v1628 = vrcp.pop %v1612
        %v1629 = vrcp.pop %v1613
        %v1630 = vrcp.pop %v1614
        %v1631 = vrcp.pop %v1615
        %v1632 = vrcp.pop %v1616
        %v1633 = vrcp.pop %v1617
        %v1634 = vrcp.pop %v1618
        %v1635 = vrcp.pop %v1619
        %v1636 = vrcp.pop %v1620
        %v1637 = vrcp.pop %v1621
        %v1638 = vrcp.pop %v1622
        %v1639 = vrcp.pop %v1623
        %v1640 = vrcp.pop %v1624
        %v1641 = vrcp.pop %v1625
        %v1642 = vrcp.pop %v1626
        %s1643 = scalar_lea.vmem %s1, 40
        %v1644 = vld [vmem:[%s1643] sm:$0xf]
        %v1645 = vld [vmem:[%s1643 + $0x4] sm:$0xf]
        %v1646 = vpack.c.bf16 %v1635, %v1627
        %v1647 = vpack.c.bf16 %v1636, %v1628
        %v1648 = vpack.c.bf16 %v1637, %v1629
        %v1649 = vpack.c.bf16 %v1638, %v1630
        %v1650 = vpack.c.bf16 %v1639, %v1631
        %v1651 = vpack.c.bf16 %v1640, %v1632
        %v1652 = vpack.c.bf16 %v1641, %v1633
        %v1653 = vpack.c.bf16 %v1642, %v1634
        %s1654 = scalar_lea.vmem %s2, 80
        %v1655 = vld [vmem:[%s1654] sm:$0xff]
        %v1656 = vld [vmem:[%s1654 + $0x8] sm:$0xff]
        %1658 = vset.pattern.permute.xlu0 0
        %1659 = vperm.xlu0 %1658, %v1655
        %v1660 = vpop.permute.xlu0 %1659
        %1663 = vset.pattern.permute.xlu0 0
        %1664 = vperm.xlu0 %1663, %v1656
        %v1665 = vpop.permute.xlu0 %1664
        %v1668 = vunpack.c.l.b16 %v1644
        %v1669 = vunpack.c.l.b16 %v1645
        %v1670 = vpack.c.b16 %v1669, %v1668
        %v1672 = vsel %vm535, %v1670, 0
        %1674 = vmatprep.subr.bf16.mxu0 %v1647
        %1675 = vmatpush1.bf16.msra.mxu0 %v1646
        %1676 = vmatprep.subr.bf16.mxu0 0
        %1677 = vmatpush1.bf16.msra.mxu0 0
        %1678 = vmatprep.subr.bf16.mxu0 0
        %1679 = vmatpush1.bf16.msra.mxu0 0
        %1680 = vmatprep.subr.bf16.mxu0 0
        %1681 = vmatpush1.bf16.msra.mxu0 0
        %1682 = vmatprep.subr.bf16.mxu0 0
        %1683 = vmatpush1.bf16.msra.mxu0 0
        %1684 = vmatprep.subr.bf16.mxu0 0
        %1685 = vmatpush1.bf16.msra.mxu0 0
        %1686 = vmatprep.subr.bf16.mxu0 0
        %1687 = vmatpush1.bf16.msra.mxu0 0
        %1688 = vmatprep.subr.bf16.mxu0 0
        %1689 = vmatpush1.bf16.msra.mxu0 0
        %1690 = vmatprep.subr.bf16.mxu0 0
        %1691 = vmatpush1.bf16.msra.mxu0 0
        %1692 = vmatprep.subr.bf16.mxu0 0
        %1693 = vmatpush1.bf16.msra.mxu0 0
        %1694 = vmatprep.subr.bf16.mxu0 0
        %1695 = vmatpush1.bf16.msra.mxu0 0
        %1696 = vmatprep.subr.bf16.mxu0 0
        %1697 = vmatpush1.bf16.msra.mxu0 0
        %1698 = vmatprep.subr.bf16.mxu0 0
        %1699 = vmatpush1.bf16.msra.mxu0 0
        %1700 = vmatprep.subr.bf16.mxu0 0
        %1701 = vmatpush1.bf16.msra.mxu0 0
        %1702 = vmatprep.subr.bf16.mxu0 0
        %1703 = vmatpush1.bf16.msra.mxu0 0
        %1704 = vmatprep.subr.bf16.mxu0 0
        %1705 = vmatpush1.bf16.msra.mxu0 0
        %1706 = vmatprep.mubr.bf16.mxu0 0
        %1707 = vmatmul.mubr.bf16.gmra.mrb[0].mxu0 %v1672
        %v1708 = vpop.f32.mrb[0].mxu0
        %v1709 = vadd.f32 %v1660, %v1708
        %v1710 = vpop.f32.mrb[0].mxu0
        %v1711 = vadd.f32 %v1660, %v1710
        %v1712 = vpop.f32.mrb[0].mxu0
        %v1713 = vpop.f32.mrb[0].mxu0
        %1714 = vdwg.mxu0
        %1715 = vmatprep.subr.bf16.mxu0 %v1649
        %1716 = vmatpush1.bf16.msra.mxu0 %v1648
        %1717 = vmatprep.subr.bf16.mxu0 0
        %1718 = vmatpush1.bf16.msra.mxu0 0
        %1719 = vmatprep.subr.bf16.mxu0 0
        %1720 = vmatpush1.bf16.msra.mxu0 0
        %1721 = vmatprep.subr.bf16.mxu0 0
        %1722 = vmatpush1.bf16.msra.mxu0 0
        %1723 = vmatprep.subr.bf16.mxu0 0
        %1724 = vmatpush1.bf16.msra.mxu0 0
        %1725 = vmatprep.subr.bf16.mxu0 0
        %1726 = vmatpush1.bf16.msra.mxu0 0
        %1727 = vmatprep.subr.bf16.mxu0 0
        %1728 = vmatpush1.bf16.msra.mxu0 0
        %1729 = vmatprep.subr.bf16.mxu0 0
        %1730 = vmatpush1.bf16.msra.mxu0 0
        %1731 = vmatprep.subr.bf16.mxu0 0
        %1732 = vmatpush1.bf16.msra.mxu0 0
        %1733 = vmatprep.subr.bf16.mxu0 0
        %1734 = vmatpush1.bf16.msra.mxu0 0
        %1735 = vmatprep.subr.bf16.mxu0 0
        %1736 = vmatpush1.bf16.msra.mxu0 0
        %1737 = vmatprep.subr.bf16.mxu0 0
        %1738 = vmatpush1.bf16.msra.mxu0 0
        %1739 = vmatprep.subr.bf16.mxu0 0
        %1740 = vmatpush1.bf16.msra.mxu0 0
        %1741 = vmatprep.subr.bf16.mxu0 0
        %1742 = vmatpush1.bf16.msra.mxu0 0
        %1743 = vmatprep.subr.bf16.mxu0 0
        %1744 = vmatpush1.bf16.msra.mxu0 0
        %1745 = vmatprep.subr.bf16.mxu0 0
        %1746 = vmatpush1.bf16.msra.mxu0 0
        %1747 = vmatprep.mubr.bf16.mxu0 0
        %1748 = vmatmul.mubr.bf16.gmra.mrb[0].mxu0 %v1672
        %v1749 = vpop.f32.mrb[0].mxu0
        %v1750 = vadd.f32 %v1660, %v1749
        %v1751 = vpop.f32.mrb[0].mxu0
        %v1752 = vadd.f32 %v1660, %v1751
        %v1753 = vpop.f32.mrb[0].mxu0
        %v1754 = vpop.f32.mrb[0].mxu0
        %1755 = vdwg.mxu0
        %1756 = vmatprep.subr.bf16.mxu0 %v1651
        %1757 = vmatpush1.bf16.msra.mxu0 %v1650
        %1758 = vmatprep.subr.bf16.mxu0 0
        %1759 = vmatpush1.bf16.msra.mxu0 0
        %1760 = vmatprep.subr.bf16.mxu0 0
        %1761 = vmatpush1.bf16.msra.mxu0 0
        %1762 = vmatprep.subr.bf16.mxu0 0
        %1763 = vmatpush1.bf16.msra.mxu0 0
        %1764 = vmatprep.subr.bf16.mxu0 0
        %1765 = vmatpush1.bf16.msra.mxu0 0
        %1766 = vmatprep.subr.bf16.mxu0 0
        %1767 = vmatpush1.bf16.msra.mxu0 0
        %1768 = vmatprep.subr.bf16.mxu0 0
        %1769 = vmatpush1.bf16.msra.mxu0 0
        %1770 = vmatprep.subr.bf16.mxu0 0
        %1771 = vmatpush1.bf16.msra.mxu0 0
        %1772 = vmatprep.subr.bf16.mxu0 0
        %1773 = vmatpush1.bf16.msra.mxu0 0
        %1774 = vmatprep.subr.bf16.mxu0 0
        %1775 = vmatpush1.bf16.msra.mxu0 0
        %1776 = vmatprep.subr.bf16.mxu0 0
        %1777 = vmatpush1.bf16.msra.mxu0 0
        %1778 = vmatprep.subr.bf16.mxu0 0
        %1779 = vmatpush1.bf16.msra.mxu0 0
        %1780 = vmatprep.subr.bf16.mxu0 0
        %1781 = vmatpush1.bf16.msra.mxu0 0
        %1782 = vmatprep.subr.bf16.mxu0 0
        %1783 = vmatpush1.bf16.msra.mxu0 0
        %1784 = vmatprep.subr.bf16.mxu0 0
        %1785 = vmatpush1.bf16.msra.mxu0 0
        %1786 = vmatprep.subr.bf16.mxu0 0
        %1787 = vmatpush1.bf16.msra.mxu0 0
        %1788 = vmatprep.mubr.bf16.mxu0 0
        %1789 = vmatmul.mubr.bf16.gmra.mrb[0].mxu0 %v1672
        %v1790 = vpop.f32.mrb[0].mxu0
        %v1791 = vadd.f32 %v1660, %v1790
        %v1792 = vpop.f32.mrb[0].mxu0
        %v1793 = vadd.f32 %v1660, %v1792
        %v1794 = vpop.f32.mrb[0].mxu0
        %v1795 = vpop.f32.mrb[0].mxu0
        %1796 = vdwg.mxu0
        %1797 = vmatprep.subr.bf16.mxu0 %v1653
        %1798 = vmatpush1.bf16.msra.mxu0 %v1652
        %1799 = vmatprep.subr.bf16.mxu0 0
        %1800 = vmatpush1.bf16.msra.mxu0 0
        %1801 = vmatprep.subr.bf16.mxu0 0
        %1802 = vmatpush1.bf16.msra.mxu0 0
        %1803 = vmatprep.subr.bf16.mxu0 0
        %1804 = vmatpush1.bf16.msra.mxu0 0
        %1805 = vmatprep.subr.bf16.mxu0 0
        %1806 = vmatpush1.bf16.msra.mxu0 0
        %1807 = vmatprep.subr.bf16.mxu0 0
        %1808 = vmatpush1.bf16.msra.mxu0 0
        %1809 = vmatprep.subr.bf16.mxu0 0
        %1810 = vmatpush1.bf16.msra.mxu0 0
        %1811 = vmatprep.subr.bf16.mxu0 0
        %1812 = vmatpush1.bf16.msra.mxu0 0
        %1813 = vmatprep.subr.bf16.mxu0 0
        %1814 = vmatpush1.bf16.msra.mxu0 0
        %1815 = vmatprep.subr.bf16.mxu0 0
        %1816 = vmatpush1.bf16.msra.mxu0 0
        %1817 = vmatprep.subr.bf16.mxu0 0
        %1818 = vmatpush1.bf16.msra.mxu0 0
        %1819 = vmatprep.subr.bf16.mxu0 0
        %1820 = vmatpush1.bf16.msra.mxu0 0
        %1821 = vmatprep.subr.bf16.mxu0 0
        %1822 = vmatpush1.bf16.msra.mxu0 0
        %1823 = vmatprep.subr.bf16.mxu0 0
        %1824 = vmatpush1.bf16.msra.mxu0 0
        %1825 = vmatprep.subr.bf16.mxu0 0
        %1826 = vmatpush1.bf16.msra.mxu0 0
        %1827 = vmatprep.subr.bf16.mxu0 0
        %1828 = vmatpush1.bf16.msra.mxu0 0
        %1829 = vmatprep.mubr.bf16.mxu0 0
        %1830 = vmatmul.mubr.bf16.gmra.mrb[0].mxu0 %v1672
        %v1831 = vpop.f32.mrb[0].mxu0
        %v1832 = vadd.f32 %v1660, %v1831
        %v1833 = vpop.f32.mrb[0].mxu0
        %v1834 = vadd.f32 %v1660, %v1833
        %v1835 = vpop.f32.mrb[0].mxu0
        %v1836 = vpop.f32.mrb[0].mxu0
        %1837 = vdwg.mxu0
        %v1838 = vsub.f32 0.0, %v1709
        %v1839 = vsub.f32 0.0, %v1711
        %v1840 = vsub.f32 0.0, %v1750
        %v1841 = vsub.f32 0.0, %v1752
        %v1842 = vsub.f32 0.0, %v1791
        %v1843 = vsub.f32 0.0, %v1793
        %v1844 = vsub.f32 0.0, %v1832
        %v1845 = vsub.f32 0.0, %v1834
        %v1846 = vmul.f32 %v1838, 1.442695
        %v1847 = vpow.pop %v1846
        %v1848 = vmul.f32 %v1839, 1.442695
        %v1849 = vpow.pop %v1848
        %v1850 = vmul.f32 %v1840, 1.442695
        %v1851 = vpow.pop %v1850
        %v1852 = vmul.f32 %v1841, 1.442695
        %v1853 = vpow.pop %v1852
        %v1854 = vmul.f32 %v1842, 1.442695
        %v1855 = vpow.pop %v1854
        %v1856 = vmul.f32 %v1843, 1.442695
        %v1857 = vpow.pop %v1856
        %v1858 = vmul.f32 %v1844, 1.442695
        %v1859 = vpow.pop %v1858
        %v1860 = vmul.f32 %v1845, 1.442695
        %v1861 = vpow.pop %v1860
        %v1862 = vadd.f32 %v1847, 1.0
        %v1863 = vadd.f32 %v1849, 1.0
        %v1864 = vadd.f32 %v1851, 1.0
        %v1865 = vadd.f32 %v1853, 1.0
        %v1866 = vadd.f32 %v1855, 1.0
        %v1867 = vadd.f32 %v1857, 1.0
        %v1868 = vadd.f32 %v1859, 1.0
        %v1869 = vadd.f32 %v1861, 1.0
        %v1870 = vrcp.pop %v1862
        %v1871 = vrcp.pop %v1863
        %v1872 = vrcp.pop %v1864
        %v1873 = vrcp.pop %v1865
        %v1874 = vrcp.pop %v1866
        %v1875 = vrcp.pop %v1867
        %v1876 = vrcp.pop %v1868
        %v1877 = vrcp.pop %v1869
        %1878 = vst [vmem:[%s186] sm:$0xff] %v1870
        %1879 = vst [vmem:[%s186 + $0x8] sm:$0xff] %v1871
        %1880 = vst [vmem:[%s186 + $0x10] sm:$0xff] %v1872
        %1881 = vst [vmem:[%s186 + $0x18] sm:$0xff] %v1873
        %1882 = vst [vmem:[%s186 + $0x20] sm:$0xff] %v1874
        %1883 = vst [vmem:[%s186 + $0x28] sm:$0xff] %v1875
        %1884 = vst [vmem:[%s186 + $0x30] sm:$0xff] %v1876
        %1885 = vst [vmem:[%s186 + $0x38] sm:$0xff] %v1877
        %s1886 = sand.u32 %s96, 1
        %s1887 = scalar_lea.sflag [#allocation4], %s1886
        %s1888 = sand.u32 %s96, 1
        %s1889 = smul.addr %s1888, 64
        %s1890 = scalar_lea.vmem [#allocation5], %s1889
        // Predicated region
        $region37: #{tpu_custom_call.1} parent=31 // pred_check
          %p1891 = pneg %p106
        $region38: #{tpu_custom_call.1} parent=31 // pred_check_branch
          %1893 = sbr.rel (%p1891) target = $region40
        $region39: #{tpu_custom_call.1} parent=31 // pred_region
          %s1894 = smul.u32 8, %s20
          %s1896 = ssub.s32 1024, 1024
          %1897 = vsyncadd %s1887, %s1896
          %s1898 = smul.addr %s1894, 128
          %s1899 = scalar_lea.hbm %s3, %s1898
          %s1901 = sshll.u32 %s1890, 4
          %s1902 = int_to_ptr.vmem [resolvable:$true] %s1901
          %1904 = dma.vmem_to_hbm [thread:$0]  %s1902, 1024, %s1899, %s1887
        $region40: #{tpu_custom_call.1} parent=31 // pred_fallthru
          _
      $region32: #{tpu_custom_call.1} parent=5 // pred_fallthru
        _
      %p1905 = scmp.le.s32.totalorder 2, %s15
      // Predicated region
      $region41: #{tpu_custom_call.1} parent=5 // pred_check
        %p1906 = pneg %p1905
      $region42: #{tpu_custom_call.1} parent=5 // pred_check_branch
        %1908 = sbr.rel (%p1906) target = $region44
      $region43: #{tpu_custom_call.1} parent=5 // pred_region
        %s1909 = ssub.s32 %s15, 2
        // Predicated region
        $region45: #{tpu_custom_call.1} parent=43 // pred_check
          %p1910 = pneg %p112
        $region46: #{tpu_custom_call.1} parent=43 // pred_check_branch
          %1912 = sbr.rel (%p1910) target = $region48
        $region47: #{tpu_custom_call.1} parent=43 // pred_region
          %s1913 = sand.u32 %s97, 1
          %s1914 = scalar_lea.sflag [#allocation4], %s1913
          %s1915 = sand.u32 %s97, 1
          %s1916 = smul.addr %s1915, 64
          %s1917 = scalar_lea.vmem [#allocation5], %s1916
          %1918 = dma.done %s1914, 1024
        $region48: #{tpu_custom_call.1} parent=43 // pred_fallthru
          _
      $region44: #{tpu_custom_call.1} parent=5 // pred_fallthru
        _
    $region6: #{tpu_custom_call.1} parent=1 // loop_footer
      %s19 = sadd.s32 1, %s15
    $region7: #{tpu_custom_call.1} parent=1 // loop_footer_branch
      %14 = sbr.rel target = $region3
    $region8: #{tpu_custom_call.1} parent=1 // loop_exit
      _
    %1919 = vsyncpa [#allocation3], 1
    %s1920 = scalar_lea.sflag [#allocation3], 1
    %1921 = vsyncpa %s1920, 1
    %1922 = vsyncpa [#allocation4], 1
    %s1923 = scalar_lea.sflag [#allocation4], 1
    %1924 = vsyncpa %s1923, 1

</llo_original>
